<compile_context>
chip_gen: v7x
topology: tpu7x:2x2x1
jax: 0.10.0
libtpu: 0.0.40
codegen_flags: <defaults>
</compile_context>

<pallas_src>
import functools

import jax
import jax.numpy as jnp
from jax.experimental import pallas as pl
from jax.experimental.pallas import tpu as pltpu

EPS = 1e-5  # PyTorch BatchNorm default eps


def _vmem():
    return pl.BlockSpec(memory_space=pltpu.MemorySpace.VMEM)


# ---------------------------------------------------------------------------
# Kernel 1: fused "small path" for the B queries.
#   sub = tanh(tanh(xs @ w1e) @ w2e)         (stand-in GCN layer 1+2, subjects)
#   rel = tanh(tanh(xr @ w1r) @ w2r)         (stand-in GCN layer 1+2, relations)
#   h   = relu(sub @ Wconv_sub + rel @ Wconv_rel + bconv)   (concat+bn0+conv+bn1)
#   y   = relu(h @ Wfc + bfc)                               (fc + bn2)
# Wconv_* is the im2col matrix of the conv (built once at init), so the whole
# conv stage is a single MXU matmul per half and needs no in-kernel reshapes.
# ---------------------------------------------------------------------------
def _small_path_kernel(xs_ref, xr_ref, w1e_ref, w2e_ref, w1r_ref, w2r_ref,
                       wcs_ref, wcr_ref, bc_ref, wfc_ref, bfc_ref, o_ref):
    sub = jnp.tanh(jnp.dot(xs_ref[...], w1e_ref[...],
                           preferred_element_type=jnp.float32))
    sub = jnp.tanh(jnp.dot(sub.astype(jnp.bfloat16), w2e_ref[...],
                           preferred_element_type=jnp.float32))

    rel = jnp.tanh(jnp.dot(xr_ref[...], w1r_ref[...],
                           preferred_element_type=jnp.float32))
    rel = jnp.tanh(jnp.dot(rel.astype(jnp.bfloat16), w2r_ref[...],
                           preferred_element_type=jnp.float32))

    # concat + reshape + bn0 + conv2d + bn1 + relu (all folded into wcs/wcr/bc)
    h = (jnp.dot(sub.astype(jnp.bfloat16), wcs_ref[...],
                 preferred_element_type=jnp.float32)
         + jnp.dot(rel.astype(jnp.bfloat16), wcr_ref[...],
                   preferred_element_type=jnp.float32)
         + bc_ref[...])
    h = jnp.maximum(h, 0.0)

    # fc + bn2 (folded) + relu
    y = jnp.dot(h.astype(jnp.bfloat16), wfc_ref[...],
                preferred_element_type=jnp.float32)
    y = jnp.maximum(y + bfc_ref[...], 0.0)
    o_ref[...] = y.astype(jnp.bfloat16)


def small_path(xs_bf16, xr_bf16, params):
    B = xs_bf16.shape[0]
    E = params["fcw_qe_bf16"].shape[1]
    return pl.pallas_call(
        _small_path_kernel,
        out_shape=jax.ShapeDtypeStruct((B, E), jnp.bfloat16),
        in_specs=[_vmem()] * 11,
        out_specs=_vmem(),
    )(xs_bf16, xr_bf16,
      params["w1_ent_bf16"], params["w2_ent_bf16"],
      params["w1_rel_bf16"], params["w2_rel_bf16"],
      params["wconv_sub_bf16"], params["wconv_rel_bf16"], params["bconv_1q"],
      params["fcw_qe_bf16"], params["fcb_1e"])


# ---------------------------------------------------------------------------
# Kernel 2: fused entity transform + score, tiled over num_ent.
# Each grid step streams one init_embed tile from HBM (bf16, the only large
# read), runs the 2-layer tanh transform in VMEM, and immediately scores it:
#   score = sigmoid(y @ ent_tile^T + bias)
# The transformed entity table never touches HBM.
# ---------------------------------------------------------------------------
def _score_kernel(y_ref, x_ref, w1_ref, w2_ref, ebias_ref, o_ref):
    h = jnp.tanh(jnp.dot(x_ref[...], w1_ref[...],
                         preferred_element_type=jnp.float32))
    ent = jnp.tanh(jnp.dot(h.astype(jnp.bfloat16), w2_ref[...],
                           preferred_element_type=jnp.float32))
    # y: [B, E] bf16 (grid-invariant, fetched once); ent: [tile_n, E]
    s = jax.lax.dot_general(
        y_ref[...], ent.astype(jnp.bfloat16),
        dimension_numbers=(((1,), (1,)), ((), ())),
        preferred_element_type=jnp.float32)
    o_ref[...] = jax.nn.sigmoid(s + ebias_ref[...])


def score_entities(y_bf16, init_embed_bf16, w1_bf16, w2_bf16, ent_bias_2d,
                   tile_n=512):
    B, E = y_bf16.shape
    num_ent, d_in = init_embed_bf16.shape
    d_mid = w1_bf16.shape[1]
    # tile_n=512 keeps >=2 "parallel" grid steps at num_ent>=1024 so v7x's two
    # TensorCores both get work; per-tile VMEM is tiny (<< 32 MiB) on all gens.
    tn = tile_n if num_ent >= tile_n else num_ent
    grid = (pl.cdiv(num_ent, tn),)

    flops = 2 * num_ent * (d_in * d_mid + d_mid * E) + 2 * B * E * num_ent
    transcendentals = num_ent * (d_mid + E) + B * num_ent
    bytes_accessed = (num_ent * d_in * 2 + B * E * 2 + num_ent * 4
                      + B * num_ent * 4 + (d_in * d_mid + d_mid * E) * 2)

    return pl.pallas_call(
        _score_kernel,
        out_shape=jax.ShapeDtypeStruct((B, num_ent), jnp.float32),
        grid=grid,
        in_specs=[pl.BlockSpec((B, E), lambda j: (0, 0)),        # y, fetched once
                  pl.BlockSpec((tn, d_in), lambda j: (j, 0)),    # init_embed tile
                  pl.BlockSpec((d_in, d_mid), lambda j: (0, 0)),  # w1, fetched once
                  pl.BlockSpec((d_mid, E), lambda j: (0, 0)),     # w2, fetched once
                  pl.BlockSpec((1, tn), lambda j: (0, j))],       # bias tile
        out_specs=pl.BlockSpec((B, tn), lambda j: (0, j)),
        compiler_params=pltpu.CompilerParams(
            dimension_semantics=("parallel",),
            vmem_limit_bytes=32 * 1024 * 1024),   # v7x-safe budget
        cost_estimate=pl.CostEstimate(flops=flops,
                                      transcendentals=transcendentals,
                                      bytes_accessed=bytes_accessed),
    )(y_bf16, init_embed_bf16, w1_bf16, w2_bf16, ent_bias_2d)


# ---------------------------------------------------------------------------
# Parameter construction (deterministic, synthetic) with BN folding and
# conv->im2col-matrix construction at init.
# ---------------------------------------------------------------------------
def init_params(key, cfg):
    ks = jax.random.split(key, 10)
    gain = 2.0 ** 0.5  # nn.init.calculate_gain('relu')

    def xavier(k, shape):
        std = gain * (2.0 / (shape[0] + shape[1])) ** 0.5
        return std * jax.random.normal(k, shape, dtype=jnp.float32)

    num_ent, num_rel = cfg["num_ent"], cfg["num_rel"]
    init_dim, gcn_dim, embed_dim = cfg["init_dim"], cfg["gcn_dim"], cfg["embed_dim"]
    F, K = cfg["num_filt"], cfg["ker_sz"]
    k_h, k_w = cfg["k_h"], cfg["k_w"]
    Ho = 2 * k_h - K + 1
    Wo = k_w - K + 1
    P = Ho * Wo
    flat_sz = P * F

    p = {}
    # Embedding tables and stand-in GCN weights stored bf16 (halves HBM stream,
    # removes per-grid-step casts inside the kernels).
    p["init_embed_bf16"] = xavier(ks[0], (num_ent, init_dim)).astype(jnp.bfloat16)
    p["init_rel_bf16"] = xavier(ks[1], (num_rel * 2, init_dim)).astype(jnp.bfloat16)
    # Stand-in weights for the two CompGCNCov layers (see TODO in header).
    p["w1_ent_bf16"] = xavier(ks[2], (init_dim, gcn_dim)).astype(jnp.bfloat16)
    p["w1_rel_bf16"] = xavier(ks[3], (init_dim, gcn_dim)).astype(jnp.bfloat16)
    p["w2_ent_bf16"] = xavier(ks[4], (gcn_dim, embed_dim)).astype(jnp.bfloat16)
    p["w2_rel_bf16"] = xavier(ks[5], (gcn_dim, embed_dim)).astype(jnp.bfloat16)

    # conv2d(1 -> num_filt, K x K) and fc(flat_sz -> embed_dim), PyTorch init.
    bound_c = (1.0 / (1 * K * K)) ** 0.5
    conv_w = jax.random.uniform(ks[6], (F, 1, K, K), jnp.float32, -bound_c, bound_c)
    conv_b = jax.random.uniform(ks[7], (F,), jnp.float32, -bound_c, bound_c)
    bound_f = (1.0 / flat_sz) ** 0.5
    fc_w = jax.random.uniform(ks[8], (embed_dim, flat_sz), jnp.float32, -bound_f, bound_f)
    fc_b = jax.random.uniform(ks[9], (embed_dim,), jnp.float32, -bound_f, bound_f)

    # --- eval-mode BatchNorm (PyTorch defaults) folded into conv / fc ---
    g0, b0, rm0, rv0 = 1.0, 0.0, 0.0, 1.0                               # bn0, C=1
    g1, b1_, rm1, rv1 = (jnp.ones(F), jnp.zeros(F), jnp.zeros(F), jnp.ones(F))
    g2, b2_, rm2, rv2 = (jnp.ones(embed_dim), jnp.zeros(embed_dim),
                         jnp.zeros(embed_dim), jnp.ones(embed_dim))
    s0 = g0 / (rv0 + EPS) ** 0.5
    t0 = b0 - rm0 * s0
    s1 = g1 * jax.lax.rsqrt(rv1 + EPS)
    t1 = b1_ - rm1 * s1
    s2 = g2 * jax.lax.rsqrt(rv2 + EPS)
    t2 = b2_ - rm2 * s2

    # bn0/bn1-folded conv weights/bias.  NOTE: bias fold assumes padding=0.
    wc = conv_w.reshape(F, K * K)                                   # [F, K*K]
    wc_eff = (s1[:, None] * s0) * wc                                # [F, K*K]
    bc_eff = s1 * (t0 * wc.sum(axis=1) + conv_b) + t1               # [F]

    # Build the im2col matrix of the conv once at init: column o = (f,ho,wo) of
    # W_conv is the conv response to the basis image e_i.  The conv stage then
    # becomes a single matmul on [sub_emb ; rel_emb] inside the kernel.
    eye_imgs = jnp.eye(2 * k_h * k_w, dtype=jnp.float32).reshape(
        2 * k_h * k_w, 1, 2 * k_h, k_w)
    basis_out = jax.lax.conv_general_dilated(
        eye_imgs, wc_eff.reshape(F, 1, K, K),
        window_strides=(1, 1), padding="VALID",
        dimension_numbers=("NCHW", "OIHW", "NCHW"))                 # [2E, F, Ho, Wo]
    w_conv = basis_out.reshape(2 * embed_dim, flat_sz)              # NCHW-flat order
    p["wconv_sub_bf16"] = w_conv[:embed_dim].astype(jnp.bfloat16)   # [E, flat_sz]
    p["wconv_rel_bf16"] = w_conv[embed_dim:].astype(jnp.bfloat16)   # [E, flat_sz]
    p["bconv_1q"] = jnp.broadcast_to(bc_eff[:, None], (F, P)).reshape(1, flat_sz)

    fc_w_eff = fc_w.T * s2[None, :]                                 # [flat_sz, E], bn2 folded
    fc_b_eff = fc_b * s2 + t2
    p["fcw_qe_bf16"] = fc_w_eff.astype(jnp.bfloat16)                # transposed once, at init
    p["fcb_1e"] = fc_b_eff.reshape(1, embed_dim)

    p["ent_bias_2d"] = jnp.zeros((1, num_ent), jnp.float32)         # self.bias
    return p


# ---------------------------------------------------------------------------
# Forward pass
# ---------------------------------------------------------------------------
def compgcn_conve_forward(params, subj, rel, cfg):
    # forward_base (stand-in): per-row transforms are applied lazily --
    # subjects/relations on the B gathered rows here, the full entity table
    # inside the score kernel (fused, never written to HBM).
    xs = jnp.take(params["init_embed_bf16"], subj, axis=0)          # [B, init_dim]
    xr = jnp.take(params["init_rel_bf16"], rel, axis=0)             # [B, init_dim]

    # concat + bn0 + conv2d + bn1 + relu + fc + bn2 + relu -> [B, E] bf16
    y = small_path(xs, xr, params)

    # sigmoid(y @ all_ent^T + bias), entity transform fused into the tile loop
    return score_entities(y, params["init_embed_bf16"],
                          params["w1_ent_bf16"], params["w2_ent_bf16"],
                          params["ent_bias_2d"],
                          tile_n=cfg.get("score_tile_n", 512))


# ---------------------------------------------------------------------------
if __name__ == "__main__":
    cfg = dict(
        num_ent=1024, num_rel=6, num_base=0,
        init_dim=32, gcn_dim=32, embed_dim=32, n_layer=2,
        k_h=4, k_w=8, ker_sz=3, num_filt=4,
        score_tile_n=512,          # 2 parallel grid steps at num_ent=1024 (v7x)
    )
    assert cfg["embed_dim"] == cfg["k_h"] * cfg["k_w"]

    params = init_params(jax.random.PRNGKey(0), cfg)

    # batch of 8 (subject, relation) queries
    B = 8
    subj = (jnp.arange(B, dtype=jnp.int32) * 97) % cfg["num_ent"]
    rel = (jnp.arange(B, dtype=jnp.int32) * 3) % (2 * cfg["num_rel"])

    fwd = jax.jit(functools.partial(compgcn_conve_forward, cfg=cfg))
    score = fwd(params, subj, rel)
    score = jax.block_until_ready(score)

    assert score.shape == (B, cfg["num_ent"])
    assert bool(jnp.all(jnp.isfinite(score)))
    assert bool(jnp.all((score >= 0.0) & (score <= 1.0)))
    print("KERNEL_OK")
</pallas_src>

<mosaic_0001>
module attributes {stable_mosaic.version = 11 : i64} {
  func.func @_small_path_kernel(%arg0: memref<8x32xbf16, #tpu.memory_space<vmem>>, %arg1: memref<8x32xbf16, #tpu.memory_space<vmem>>, %arg2: memref<32x32xbf16, #tpu.memory_space<vmem>>, %arg3: memref<32x32xbf16, #tpu.memory_space<vmem>>, %arg4: memref<32x32xbf16, #tpu.memory_space<vmem>>, %arg5: memref<32x32xbf16, #tpu.memory_space<vmem>>, %arg6: memref<32x144xbf16, #tpu.memory_space<vmem>>, %arg7: memref<32x144xbf16, #tpu.memory_space<vmem>>, %arg8: memref<1x144xf32, #tpu.memory_space<vmem>>, %arg9: memref<144x32xbf16, #tpu.memory_space<vmem>>, %arg10: memref<1x32xf32, #tpu.memory_space<vmem>>, %arg11: memref<8x32xbf16, #tpu.memory_space<vmem>>) attributes {dimension_semantics = [], scalar_prefetch = 0 : i64, scratch_operands = 0 : i64, tpu.core_type = #tpu.core_type<tc>} {
    %c0 = arith.constant 0 : index
    %c0_0 = arith.constant 0 : index
    %0 = vector.load %arg0[%c0, %c0_0] : memref<8x32xbf16, #tpu.memory_space<vmem>>, vector<8x32xbf16>
    %c0_1 = arith.constant 0 : index
    %c0_2 = arith.constant 0 : index
    %1 = vector.load %arg2[%c0_1, %c0_2] : memref<32x32xbf16, #tpu.memory_space<vmem>>, vector<32x32xbf16>
    %cst = arith.constant dense<0.000000e+00> : vector<8x32xf32>
    %2 = tpu.matmul %0, %1, %cst {dimension_numbers = #tpu.dot_dimension_numbers<[1], [0], [0], [1], [0, 0, 1, 1], [], []>} : vector<8x32xbf16>, vector<32x32xbf16>, vector<8x32xf32> -> vector<8x32xf32>
    %3 = math.tanh %2 : vector<8x32xf32>
    %4 = arith.truncf %3 : vector<8x32xf32> to vector<8x32xbf16>
    %c0_3 = arith.constant 0 : index
    %c0_4 = arith.constant 0 : index
    %5 = vector.load %arg3[%c0_3, %c0_4] : memref<32x32xbf16, #tpu.memory_space<vmem>>, vector<32x32xbf16>
    %cst_5 = arith.constant dense<0.000000e+00> : vector<8x32xf32>
    %6 = tpu.matmul %4, %5, %cst_5 {dimension_numbers = #tpu.dot_dimension_numbers<[1], [0], [0], [1], [0, 0, 1, 1], [], []>} : vector<8x32xbf16>, vector<32x32xbf16>, vector<8x32xf32> -> vector<8x32xf32>
    %7 = math.tanh %6 : vector<8x32xf32>
    %c0_6 = arith.constant 0 : index
    %c0_7 = arith.constant 0 : index
    %8 = vector.load %arg1[%c0_6, %c0_7] : memref<8x32xbf16, #tpu.memory_space<vmem>>, vector<8x32xbf16>
    %c0_8 = arith.constant 0 : index
    %c0_9 = arith.constant 0 : index
    %9 = vector.load %arg4[%c0_8, %c0_9] : memref<32x32xbf16, #tpu.memory_space<vmem>>, vector<32x32xbf16>
    %cst_10 = arith.constant dense<0.000000e+00> : vector<8x32xf32>
    %10 = tpu.matmul %8, %9, %cst_10 {dimension_numbers = #tpu.dot_dimension_numbers<[1], [0], [0], [1], [0, 0, 1, 1], [], []>} : vector<8x32xbf16>, vector<32x32xbf16>, vector<8x32xf32> -> vector<8x32xf32>
    %11 = math.tanh %10 : vector<8x32xf32>
    %12 = arith.truncf %11 : vector<8x32xf32> to vector<8x32xbf16>
    %c0_11 = arith.constant 0 : index
    %c0_12 = arith.constant 0 : index
    %13 = vector.load %arg5[%c0_11, %c0_12] : memref<32x32xbf16, #tpu.memory_space<vmem>>, vector<32x32xbf16>
    %cst_13 = arith.constant dense<0.000000e+00> : vector<8x32xf32>
    %14 = tpu.matmul %12, %13, %cst_13 {dimension_numbers = #tpu.dot_dimension_numbers<[1], [0], [0], [1], [0, 0, 1, 1], [], []>} : vector<8x32xbf16>, vector<32x32xbf16>, vector<8x32xf32> -> vector<8x32xf32>
    %15 = math.tanh %14 : vector<8x32xf32>
    %16 = arith.truncf %7 : vector<8x32xf32> to vector<8x32xbf16>
    %c0_14 = arith.constant 0 : index
    %c0_15 = arith.constant 0 : index
    %17 = vector.load %arg6[%c0_14, %c0_15] : memref<32x144xbf16, #tpu.memory_space<vmem>>, vector<32x144xbf16>
    %cst_16 = arith.constant dense<0.000000e+00> : vector<8x144xf32>
    %18 = tpu.matmul %16, %17, %cst_16 {dimension_numbers = #tpu.dot_dimension_numbers<[1], [0], [0], [1], [0, 0, 1, 1], [], []>} : vector<8x32xbf16>, vector<32x144xbf16>, vector<8x144xf32> -> vector<8x144xf32>
    %19 = arith.truncf %15 : vector<8x32xf32> to vector<8x32xbf16>
    %c0_17 = arith.constant 0 : index
    %c0_18 = arith.constant 0 : index
    %20 = vector.load %arg7[%c0_17, %c0_18] : memref<32x144xbf16, #tpu.memory_space<vmem>>, vector<32x144xbf16>
    %cst_19 = arith.constant dense<0.000000e+00> : vector<8x144xf32>
    %21 = tpu.matmul %19, %20, %cst_19 {dimension_numbers = #tpu.dot_dimension_numbers<[1], [0], [0], [1], [0, 0, 1, 1], [], []>} : vector<8x32xbf16>, vector<32x144xbf16>, vector<8x144xf32> -> vector<8x144xf32>
    %22 = arith.addf %18, %21 : vector<8x144xf32>
    %c0_20 = arith.constant 0 : index
    %c0_21 = arith.constant 0 : index
    %23 = vector.load %arg8[%c0_20, %c0_21] : memref<1x144xf32, #tpu.memory_space<vmem>>, vector<1x144xf32>
    %24 = vector.broadcast %23 : vector<1x144xf32> to vector<8x144xf32>
    %25 = arith.addf %22, %24 : vector<8x144xf32>
    %cst_22 = arith.constant 0.000000e+00 : f32
    %26 = vector.broadcast %cst_22 : f32 to vector<8x144xf32>
    %27 = arith.maximumf %25, %26 : vector<8x144xf32>
    %28 = arith.truncf %27 : vector<8x144xf32> to vector<8x144xbf16>
    %c0_23 = arith.constant 0 : index
    %c0_24 = arith.constant 0 : index
    %29 = vector.load %arg9[%c0_23, %c0_24] : memref<144x32xbf16, #tpu.memory_space<vmem>>, vector<144x32xbf16>
    %cst_25 = arith.constant dense<0.000000e+00> : vector<8x32xf32>
    %30 = tpu.matmul %28, %29, %cst_25 {dimension_numbers = #tpu.dot_dimension_numbers<[1], [0], [0], [1], [0, 0, 1, 1], [], []>} : vector<8x144xbf16>, vector<144x32xbf16>, vector<8x32xf32> -> vector<8x32xf32>
    %c0_26 = arith.constant 0 : index
    %c0_27 = arith.constant 0 : index
    %31 = vector.load %arg10[%c0_26, %c0_27] : memref<1x32xf32, #tpu.memory_space<vmem>>, vector<1x32xf32>
    %32 = vector.broadcast %31 : vector<1x32xf32> to vector<8x32xf32>
    %33 = arith.addf %30, %32 : vector<8x32xf32>
    %cst_28 = arith.constant 0.000000e+00 : f32
    %34 = vector.broadcast %cst_28 : f32 to vector<8x32xf32>
    %35 = arith.maximumf %33, %34 : vector<8x32xf32>
    %36 = arith.truncf %35 : vector<8x32xf32> to vector<8x32xbf16>
    %c0_29 = arith.constant 0 : index
    %c0_30 = arith.constant 0 : index
    %37 = vector.load %arg11[%c0_29, %c0_30] : memref<8x32xbf16, #tpu.memory_space<vmem>>, vector<8x32xbf16>
    tpu.vector_store %arg11[%c0_29, %c0_30], %36 {strides = array<i32>} : memref<8x32xbf16, #tpu.memory_space<vmem>>, vector<8x32xbf16>,
    return
  }
}

module attributes {stable_mosaic.version = 11 : i64} {
  func.func @_score_kernel(%arg0: i32, %arg1: memref<8x32xbf16, #tpu.memory_space<vmem>>, %arg2: memref<512x32xbf16, #tpu.memory_space<vmem>>, %arg3: memref<32x32xbf16, #tpu.memory_space<vmem>>, %arg4: memref<32x32xbf16, #tpu.memory_space<vmem>>, %arg5: memref<1x512xf32, #tpu.memory_space<vmem>>, %arg6: memref<8x512xf32, #tpu.memory_space<vmem>>) attributes {dimension_semantics = [#tpu.dimension_semantics<parallel>], iteration_bounds = array<i64: 2>, scalar_prefetch = 0 : i64, scratch_operands = 0 : i64, tpu.core_type = #tpu.core_type<tc>, window_params = [{pipeline_mode = #tpu.pipeline_mode<synchronous>, transform_indices = @transform_0, window_bounds = array<i64: 8, 32>}, {transform_indices = @transform_1, window_bounds = array<i64: 512, 32>}, {pipeline_mode = #tpu.pipeline_mode<synchronous>, transform_indices = @transform_2, window_bounds = array<i64: 32, 32>}, {pipeline_mode = #tpu.pipeline_mode<synchronous>, transform_indices = @transform_3, window_bounds = array<i64: 32, 32>}, {transform_indices = @transform_4, window_bounds = array<i64: 1, 512>}, {transform_indices = @transform_5, window_bounds = array<i64: 8, 512>}]} {
    %c0 = arith.constant 0 : index
    %c0_0 = arith.constant 0 : index
    %0 = vector.load %arg2[%c0, %c0_0] : memref<512x32xbf16, #tpu.memory_space<vmem>>, vector<512x32xbf16>
    %c0_1 = arith.constant 0 : index
    %c0_2 = arith.constant 0 : index
    %1 = vector.load %arg3[%c0_1, %c0_2] : memref<32x32xbf16, #tpu.memory_space<vmem>>, vector<32x32xbf16>
    %cst = arith.constant dense<0.000000e+00> : vector<512x32xf32>
    %2 = tpu.matmul %0, %1, %cst {dimension_numbers = #tpu.dot_dimension_numbers<[1], [0], [0], [1], [0, 0, 1, 1], [], []>} : vector<512x32xbf16>, vector<32x32xbf16>, vector<512x32xf32> -> vector<512x32xf32>
    %3 = math.tanh %2 : vector<512x32xf32>
    %4 = arith.truncf %3 : vector<512x32xf32> to vector<512x32xbf16>
    %c0_3 = arith.constant 0 : index
    %c0_4 = arith.constant 0 : index
    %5 = vector.load %arg4[%c0_3, %c0_4] : memref<32x32xbf16, #tpu.memory_space<vmem>>, vector<32x32xbf16>
    %cst_5 = arith.constant dense<0.000000e+00> : vector<512x32xf32>
    %6 = tpu.matmul %4, %5, %cst_5 {dimension_numbers = #tpu.dot_dimension_numbers<[1], [0], [0], [1], [0, 0, 1, 1], [], []>} : vector<512x32xbf16>, vector<32x32xbf16>, vector<512x32xf32> -> vector<512x32xf32>
    %7 = math.tanh %6 : vector<512x32xf32>
    %c0_6 = arith.constant 0 : index
    %c0_7 = arith.constant 0 : index
    %8 = vector.load %arg1[%c0_6, %c0_7] : memref<8x32xbf16, #tpu.memory_space<vmem>>, vector<8x32xbf16>
    %9 = arith.truncf %7 : vector<512x32xf32> to vector<512x32xbf16>
    %cst_8 = arith.constant dense<0.000000e+00> : vector<8x512xf32>
    %10 = tpu.matmul %8, %9, %cst_8 {dimension_numbers = #tpu.dot_dimension_numbers<[1], [1], [0], [0], [0, 0, 1, 0], [], []>} : vector<8x32xbf16>, vector<512x32xbf16>, vector<8x512xf32> -> vector<8x512xf32>
    %c0_9 = arith.constant 0 : index
    %c0_10 = arith.constant 0 : index
    %11 = vector.load %arg5[%c0_9, %c0_10] : memref<1x512xf32, #tpu.memory_space<vmem>>, vector<1x512xf32>
    %12 = vector.broadcast %11 : vector<1x512xf32> to vector<8x512xf32>
    %13 = arith.addf %10, %12 : vector<8x512xf32>
    %14 = arith.negf %13 : vector<8x512xf32>
    %15 = math.exp %14 : vector<8x512xf32>
    %cst_11 = arith.constant 1.000000e+00 : f32
    %16 = vector.broadcast %cst_11 : f32 to vector<8x512xf32>
    %17 = arith.addf %16, %15 : vector<8x512xf32>
    %18 = arith.divf %16, %17 : vector<8x512xf32>
    %c0_12 = arith.constant 0 : index
    %c0_13 = arith.constant 0 : index
    %19 = vector.load %arg6[%c0_12, %c0_13] : memref<8x512xf32, #tpu.memory_space<vmem>>, vector<8x512xf32>
    tpu.vector_store %arg6[%c0_12, %c0_13], %18 {strides = array<i32>} : memref<8x512xf32, #tpu.memory_space<vmem>>, vector<8x512xf32>,
    return
  }
  func.func @transform_0(%arg0: i32) -> (i32, i32) {
    %c0_i32 = arith.constant 0 : i32
    %c0_i32_0 = arith.constant 0 : i32
    %c0_i32_1 = arith.constant 0 : i32
    return %c0_i32, %c0_i32_0 : i32, i32
  }
  func.func @transform_1(%arg0: i32) -> (i32, i32) {
    %c0_i32 = arith.constant 0 : i32
    %c0_i32_0 = arith.constant 0 : i32
    return %arg0, %c0_i32 : i32, i32
  }
  func.func @transform_2(%arg0: i32) -> (i32, i32) {
    %c0_i32 = arith.constant 0 : i32
    %c0_i32_0 = arith.constant 0 : i32
    %c0_i32_1 = arith.constant 0 : i32
    return %c0_i32, %c0_i32_0 : i32, i32
  }
  func.func @transform_3(%arg0: i32) -> (i32, i32) {
    %c0_i32 = arith.constant 0 : i32
    %c0_i32_0 = arith.constant 0 : i32
    %c0_i32_1 = arith.constant 0 : i32
    return %c0_i32, %c0_i32_0 : i32, i32
  }
  func.func @transform_4(%arg0: i32) -> (i32, i32) {
    %c0_i32 = arith.constant 0 : i32
    %c0_i32_0 = arith.constant 0 : i32
    return %c0_i32, %arg0 : i32, i32
  }
  func.func @transform_5(%arg0: i32) -> (i32, i32) {
    %c0_i32 = arith.constant 0 : i32
    %c0_i32_0 = arith.constant 0 : i32
    return %c0_i32, %arg0 : i32, i32
  }
}

</mosaic_0001>

<llo_original>
// kernel: compgcn_conve_forward.2
$region0: #{compgcn_conve_forward.2}
  #allocation0 [shape = 'u32[]', space=smem, size = 0x4, offset = 0x4, fixed_abs, tag = 'smem constant byte address 0x4 - core index']
  #allocation1 [shape = 'u32[144,128]{1,0:T(1,128)}', space=vmem, size = 0x12000, scoped, tag = 'internal scratch']
  %s0 = inlined_call_operand.vmem [shape: bf16[8,32], index: 0, kind: input, shape index: {}]
  %s1 = inlined_call_operand.vmem [shape: bf16[8,32], index: 1, kind: input, shape index: {}]
  %s2 = inlined_call_operand.vmem [shape: bf16[32,32], index: 2, kind: input, shape index: {}]
  %s3 = inlined_call_operand.vmem [shape: bf16[32,32], index: 3, kind: input, shape index: {}]
  %s4 = inlined_call_operand.vmem [shape: bf16[32,32], index: 4, kind: input, shape index: {}]
  %s5 = inlined_call_operand.vmem [shape: bf16[32,32], index: 5, kind: input, shape index: {}]
  %s6 = inlined_call_operand.vmem [shape: bf16[32,144], index: 6, kind: input, shape index: {}]
  %s7 = inlined_call_operand.vmem [shape: bf16[32,144], index: 7, kind: input, shape index: {}]
  %s8 = inlined_call_operand.vmem [shape: f32[1,144], index: 8, kind: input, shape index: {}]
  %s9 = inlined_call_operand.vmem [shape: bf16[144,32], index: 9, kind: input, shape index: {}]
  %s10 = inlined_call_operand.vmem [shape: f32[1,32], index: 10, kind: input, shape index: {}]
  %s11 = inlined_call_operand.vmem [shape: bf16[8,32], index: 11, kind: output, shape index: {}]
  %s12 = sld [smem:[#allocation0]]
  $region54: #{compgcn_conve_forward.2} parent=0
    _
  %s14 = ssub.s32 1, %s12
  %s15 = scalar_select 0, %s14, %s12
  // Predicated region
  $region2: #{compgcn_conve_forward.2} parent=0 // pred_check
    _
  $region3: #{compgcn_conve_forward.2} parent=0 // pred_check_branch
    %17 = sbr.rel (0) target = $region5
  $region4: #{compgcn_conve_forward.2} parent=0 // pred_region
    _
  $region5: #{compgcn_conve_forward.2} parent=0 // pred_fallthru
    _
  // Predicated region
  $region6: #{compgcn_conve_forward.2} parent=0 // pred_check
    _
  $region7: #{compgcn_conve_forward.2} parent=0 // pred_check_branch
    %19 = sbr.rel (0) target = $region9
  $region8: #{compgcn_conve_forward.2} parent=0 // pred_region
    _
  $region9: #{compgcn_conve_forward.2} parent=0 // pred_fallthru
    _
  // Predicated region
  $region10: #{compgcn_conve_forward.2} parent=0 // pred_check
    _
  $region11: #{compgcn_conve_forward.2} parent=0 // pred_check_branch
    %21 = sbr.rel (0) target = $region13
  $region12: #{compgcn_conve_forward.2} parent=0 // pred_region
    _
  $region13: #{compgcn_conve_forward.2} parent=0 // pred_fallthru
    _
  // Predicated region
  $region14: #{compgcn_conve_forward.2} parent=0 // pred_check
    _
  $region15: #{compgcn_conve_forward.2} parent=0 // pred_check_branch
    %23 = sbr.rel (0) target = $region17
  $region16: #{compgcn_conve_forward.2} parent=0 // pred_region
    _
  $region17: #{compgcn_conve_forward.2} parent=0 // pred_fallthru
    _
  // Predicated region
  $region18: #{compgcn_conve_forward.2} parent=0 // pred_check
    _
  $region19: #{compgcn_conve_forward.2} parent=0 // pred_check_branch
    %25 = sbr.rel (0) target = $region21
  $region20: #{compgcn_conve_forward.2} parent=0 // pred_region
    _
  $region21: #{compgcn_conve_forward.2} parent=0 // pred_fallthru
    _
  // Predicated region
  $region22: #{compgcn_conve_forward.2} parent=0 // pred_check
    _
  $region23: #{compgcn_conve_forward.2} parent=0 // pred_check_branch
    %27 = sbr.rel (0) target = $region25
  $region24: #{compgcn_conve_forward.2} parent=0 // pred_region
    _
  $region25: #{compgcn_conve_forward.2} parent=0 // pred_fallthru
    _
  // Predicated region
  $region26: #{compgcn_conve_forward.2} parent=0 // pred_check
    _
  $region27: #{compgcn_conve_forward.2} parent=0 // pred_check_branch
    %29 = sbr.rel (0) target = $region29
  $region28: #{compgcn_conve_forward.2} parent=0 // pred_region
    _
  $region29: #{compgcn_conve_forward.2} parent=0 // pred_fallthru
    _
  // Predicated region
  $region30: #{compgcn_conve_forward.2} parent=0 // pred_check
    _
  $region31: #{compgcn_conve_forward.2} parent=0 // pred_check_branch
    %31 = sbr.rel (0) target = $region33
  $region32: #{compgcn_conve_forward.2} parent=0 // pred_region
    _
  $region33: #{compgcn_conve_forward.2} parent=0 // pred_fallthru
    _
  // Predicated region
  $region34: #{compgcn_conve_forward.2} parent=0 // pred_check
    _
  $region35: #{compgcn_conve_forward.2} parent=0 // pred_check_branch
    %33 = sbr.rel (0) target = $region37
  $region36: #{compgcn_conve_forward.2} parent=0 // pred_region
    _
  $region37: #{compgcn_conve_forward.2} parent=0 // pred_fallthru
    _
  // Predicated region
  $region38: #{compgcn_conve_forward.2} parent=0 // pred_check
    _
  $region39: #{compgcn_conve_forward.2} parent=0 // pred_check_branch
    %35 = sbr.rel (0) target = $region41
  $region40: #{compgcn_conve_forward.2} parent=0 // pred_region
    _
  $region41: #{compgcn_conve_forward.2} parent=0 // pred_fallthru
    _
  // Predicated region
  $region42: #{compgcn_conve_forward.2} parent=0 // pred_check
    _
  $region43: #{compgcn_conve_forward.2} parent=0 // pred_check_branch
    %37 = sbr.rel (0) target = $region45
  $region44: #{compgcn_conve_forward.2} parent=0 // pred_region
    _
  $region45: #{compgcn_conve_forward.2} parent=0 // pred_fallthru
    _
  %v39 = vld [vmem:[%s0] sm:$0xf]
  %v40 = vld [vmem:[%s2] sm:$0xf]
  %v41 = vld [vmem:[%s2 + $0x4] sm:$0xf]
  %v42 = vld [vmem:[%s2 + $0x8] sm:$0xf]
  %v43 = vld [vmem:[%s2 + $0xc] sm:$0xf]
  %v48 = vunpack.c.l.b16 %v40
  %v49 = vunpack.c.l.b16 %v41
  %v50 = vunpack.c.l.b16 %v42
  %v51 = vunpack.c.l.b16 %v43
  %v52 = vpack.c.b16 %v49, %v48
  %v53 = vpack.c.b16 %v51, %v50
  %vm56 = vcmask 261120
  %v58 = vsel %vm56, %v39, 0
  %60 = vmatprep.subr.bf16.mxu0 0
  %61 = vmatpush1.bf16.msra.mxu0 %v52
  %62 = vmatprep.subr.bf16.mxu0 0
  %63 = vmatpush1.bf16.msra.mxu0 %v53
  %64 = vmatprep.subr.bf16.mxu0 0
  %65 = vmatpush1.bf16.msra.mxu0 0
  %66 = vmatprep.subr.bf16.mxu0 0
  %67 = vmatpush1.bf16.msra.mxu0 0
  %68 = vmatprep.subr.bf16.mxu0 0
  %69 = vmatpush1.bf16.msra.mxu0 0
  %70 = vmatprep.subr.bf16.mxu0 0
  %71 = vmatpush1.bf16.msra.mxu0 0
  %72 = vmatprep.subr.bf16.mxu0 0
  %73 = vmatpush1.bf16.msra.mxu0 0
  %74 = vmatprep.subr.bf16.mxu0 0
  %75 = vmatpush1.bf16.msra.mxu0 0
  %76 = vmatprep.subr.bf16.mxu0 0
  %77 = vmatpush1.bf16.msra.mxu0 0
  %78 = vmatprep.subr.bf16.mxu0 0
  %79 = vmatpush1.bf16.msra.mxu0 0
  %80 = vmatprep.subr.bf16.mxu0 0
  %81 = vmatpush1.bf16.msra.mxu0 0
  %82 = vmatprep.subr.bf16.mxu0 0
  %83 = vmatpush1.bf16.msra.mxu0 0
  %84 = vmatprep.subr.bf16.mxu0 0
  %85 = vmatpush1.bf16.msra.mxu0 0
  %86 = vmatprep.subr.bf16.mxu0 0
  %87 = vmatpush1.bf16.msra.mxu0 0
  %88 = vmatprep.subr.bf16.mxu0 0
  %89 = vmatpush1.bf16.msra.mxu0 0
  %90 = vmatprep.subr.bf16.mxu0 0
  %91 = vmatpush1.bf16.msra.mxu0 0
  %92 = vmatprep.mubr.bf16.mxu0 0
  %93 = vmatmul.mubr.bf16.gmra.mrb[0].mxu0 %v58
  %v94 = vpop.f32.mrb[0].mxu0
  %v95 = vadd.f32 0.0, %v94
  %v96 = vpop.f32.mrb[0].mxu0
  %v97 = vpop.f32.mrb[0].mxu0
  %v98 = vpop.f32.mrb[0].mxu0
  %99 = vdwg.mxu0
  %v100 = vtanh.pop %v95
  %v101 = vpack.c.bf16 %v100, %v100
  %v102 = vld [vmem:[%s3] sm:$0xf]
  %v103 = vld [vmem:[%s3 + $0x4] sm:$0xf]
  %v104 = vld [vmem:[%s3 + $0x8] sm:$0xf]
  %v105 = vld [vmem:[%s3 + $0xc] sm:$0xf]
  %v110 = vunpack.c.l.b16 %v102
  %v111 = vunpack.c.l.b16 %v103
  %v112 = vunpack.c.l.b16 %v104
  %v113 = vunpack.c.l.b16 %v105
  %v114 = vpack.c.b16 %v111, %v110
  %v115 = vpack.c.b16 %v113, %v112
  %v119 = vsel %vm56, %v101, 0
  %121 = vmatprep.subr.bf16.mxu0 0
  %122 = vmatpush1.bf16.msra.mxu0 %v114
  %123 = vmatprep.subr.bf16.mxu0 0
  %124 = vmatpush1.bf16.msra.mxu0 %v115
  %125 = vmatprep.subr.bf16.mxu0 0
  %126 = vmatpush1.bf16.msra.mxu0 0
  %127 = vmatprep.subr.bf16.mxu0 0
  %128 = vmatpush1.bf16.msra.mxu0 0
  %129 = vmatprep.subr.bf16.mxu0 0
  %130 = vmatpush1.bf16.msra.mxu0 0
  %131 = vmatprep.subr.bf16.mxu0 0
  %132 = vmatpush1.bf16.msra.mxu0 0
  %133 = vmatprep.subr.bf16.mxu0 0
  %134 = vmatpush1.bf16.msra.mxu0 0
  %135 = vmatprep.subr.bf16.mxu0 0
  %136 = vmatpush1.bf16.msra.mxu0 0
  %137 = vmatprep.subr.bf16.mxu0 0
  %138 = vmatpush1.bf16.msra.mxu0 0
  %139 = vmatprep.subr.bf16.mxu0 0
  %140 = vmatpush1.bf16.msra.mxu0 0
  %141 = vmatprep.subr.bf16.mxu0 0
  %142 = vmatpush1.bf16.msra.mxu0 0
  %143 = vmatprep.subr.bf16.mxu0 0
  %144 = vmatpush1.bf16.msra.mxu0 0
  %145 = vmatprep.subr.bf16.mxu0 0
  %146 = vmatpush1.bf16.msra.mxu0 0
  %147 = vmatprep.subr.bf16.mxu0 0
  %148 = vmatpush1.bf16.msra.mxu0 0
  %149 = vmatprep.subr.bf16.mxu0 0
  %150 = vmatpush1.bf16.msra.mxu0 0
  %151 = vmatprep.subr.bf16.mxu0 0
  %152 = vmatpush1.bf16.msra.mxu0 0
  %153 = vmatprep.mubr.bf16.mxu0 0
  %154 = vmatmul.mubr.bf16.gmra.mrb[0].mxu0 %v119
  %v155 = vpop.f32.mrb[0].mxu0
  %v156 = vadd.f32 0.0, %v155
  %v157 = vpop.f32.mrb[0].mxu0
  %v158 = vpop.f32.mrb[0].mxu0
  %v159 = vpop.f32.mrb[0].mxu0
  %160 = vdwg.mxu0
  %v161 = vtanh.pop %v156
  %v162 = vld [vmem:[%s1] sm:$0xf]
  %v163 = vld [vmem:[%s4] sm:$0xf]
  %v164 = vld [vmem:[%s4 + $0x4] sm:$0xf]
  %v165 = vld [vmem:[%s4 + $0x8] sm:$0xf]
  %v166 = vld [vmem:[%s4 + $0xc] sm:$0xf]
  %v171 = vunpack.c.l.b16 %v163
  %v172 = vunpack.c.l.b16 %v164
  %v173 = vunpack.c.l.b16 %v165
  %v174 = vunpack.c.l.b16 %v166
  %v175 = vpack.c.b16 %v172, %v171
  %v176 = vpack.c.b16 %v174, %v173
  %v180 = vsel %vm56, %v162, 0
  %182 = vmatprep.subr.bf16.mxu0 0
  %183 = vmatpush1.bf16.msra.mxu0 %v175
  %184 = vmatprep.subr.bf16.mxu0 0
  %185 = vmatpush1.bf16.msra.mxu0 %v176
  %186 = vmatprep.subr.bf16.mxu0 0
  %187 = vmatpush1.bf16.msra.mxu0 0
  %188 = vmatprep.subr.bf16.mxu0 0
  %189 = vmatpush1.bf16.msra.mxu0 0
  %190 = vmatprep.subr.bf16.mxu0 0
  %191 = vmatpush1.bf16.msra.mxu0 0
  %192 = vmatprep.subr.bf16.mxu0 0
  %193 = vmatpush1.bf16.msra.mxu0 0
  %194 = vmatprep.subr.bf16.mxu0 0
  %195 = vmatpush1.bf16.msra.mxu0 0
  %196 = vmatprep.subr.bf16.mxu0 0
  %197 = vmatpush1.bf16.msra.mxu0 0
  %198 = vmatprep.subr.bf16.mxu0 0
  %199 = vmatpush1.bf16.msra.mxu0 0
  %200 = vmatprep.subr.bf16.mxu0 0
  %201 = vmatpush1.bf16.msra.mxu0 0
  %202 = vmatprep.subr.bf16.mxu0 0
  %203 = vmatpush1.bf16.msra.mxu0 0
  %204 = vmatprep.subr.bf16.mxu0 0
  %205 = vmatpush1.bf16.msra.mxu0 0
  %206 = vmatprep.subr.bf16.mxu0 0
  %207 = vmatpush1.bf16.msra.mxu0 0
  %208 = vmatprep.subr.bf16.mxu0 0
  %209 = vmatpush1.bf16.msra.mxu0 0
  %210 = vmatprep.subr.bf16.mxu0 0
  %211 = vmatpush1.bf16.msra.mxu0 0
  %212 = vmatprep.subr.bf16.mxu0 0
  %213 = vmatpush1.bf16.msra.mxu0 0
  %214 = vmatprep.mubr.bf16.mxu0 0
  %215 = vmatmul.mubr.bf16.gmra.mrb[0].mxu0 %v180
  %v216 = vpop.f32.mrb[0].mxu0
  %v217 = vadd.f32 0.0, %v216
  %v218 = vpop.f32.mrb[0].mxu0
  %v219 = vpop.f32.mrb[0].mxu0
  %v220 = vpop.f32.mrb[0].mxu0
  %221 = vdwg.mxu0
  %v222 = vtanh.pop %v217
  %v223 = vpack.c.bf16 %v222, %v222
  %v224 = vld [vmem:[%s5] sm:$0xf]
  %v225 = vld [vmem:[%s5 + $0x4] sm:$0xf]
  %v226 = vld [vmem:[%s5 + $0x8] sm:$0xf]
  %v227 = vld [vmem:[%s5 + $0xc] sm:$0xf]
  %v232 = vunpack.c.l.b16 %v224
  %v233 = vunpack.c.l.b16 %v225
  %v234 = vunpack.c.l.b16 %v226
  %v235 = vunpack.c.l.b16 %v227
  %v236 = vpack.c.b16 %v233, %v232
  %v237 = vpack.c.b16 %v235, %v234
  %v241 = vsel %vm56, %v223, 0
  %243 = vmatprep.subr.bf16.mxu0 0
  %244 = vmatpush1.bf16.msra.mxu0 %v236
  %245 = vmatprep.subr.bf16.mxu0 0
  %246 = vmatpush1.bf16.msra.mxu0 %v237
  %247 = vmatprep.subr.bf16.mxu0 0
  %248 = vmatpush1.bf16.msra.mxu0 0
  %249 = vmatprep.subr.bf16.mxu0 0
  %250 = vmatpush1.bf16.msra.mxu0 0
  %251 = vmatprep.subr.bf16.mxu0 0
  %252 = vmatpush1.bf16.msra.mxu0 0
  %253 = vmatprep.subr.bf16.mxu0 0
  %254 = vmatpush1.bf16.msra.mxu0 0
  %255 = vmatprep.subr.bf16.mxu0 0
  %256 = vmatpush1.bf16.msra.mxu0 0
  %257 = vmatprep.subr.bf16.mxu0 0
  %258 = vmatpush1.bf16.msra.mxu0 0
  %259 = vmatprep.subr.bf16.mxu0 0
  %260 = vmatpush1.bf16.msra.mxu0 0
  %261 = vmatprep.subr.bf16.mxu0 0
  %262 = vmatpush1.bf16.msra.mxu0 0
  %263 = vmatprep.subr.bf16.mxu0 0
  %264 = vmatpush1.bf16.msra.mxu0 0
  %265 = vmatprep.subr.bf16.mxu0 0
  %266 = vmatpush1.bf16.msra.mxu0 0
  %267 = vmatprep.subr.bf16.mxu0 0
  %268 = vmatpush1.bf16.msra.mxu0 0
  %269 = vmatprep.subr.bf16.mxu0 0
  %270 = vmatpush1.bf16.msra.mxu0 0
  %271 = vmatprep.subr.bf16.mxu0 0
  %272 = vmatpush1.bf16.msra.mxu0 0
  %273 = vmatprep.subr.bf16.mxu0 0
  %274 = vmatpush1.bf16.msra.mxu0 0
  %275 = vmatprep.mubr.bf16.mxu0 0
  %276 = vmatmul.mubr.bf16.gmra.mrb[0].mxu0 %v241
  %v277 = vpop.f32.mrb[0].mxu0
  %v278 = vadd.f32 0.0, %v277
  %v279 = vpop.f32.mrb[0].mxu0
  %v280 = vpop.f32.mrb[0].mxu0
  %v281 = vpop.f32.mrb[0].mxu0
  %282 = vdwg.mxu0
  %v283 = vtanh.pop %v278
  %v284 = vpack.c.bf16 %v161, %v161
  %v285 = vld [vmem:[%s6] sm:$0xff]
  %v286 = vld [vmem:[%s6 + $0x8] sm:$0xff]
  %v287 = vld [vmem:[%s6 + $0x10] sm:$0xff]
  %v288 = vld [vmem:[%s6 + $0x18] sm:$0xff]
  %v289 = vpack.c.bf16 %v283, %v283
  %v290 = vld [vmem:[%s7] sm:$0xff]
  %v291 = vld [vmem:[%s7 + $0x8] sm:$0xff]
  %v292 = vld [vmem:[%s7 + $0x10] sm:$0xff]
  %v293 = vld [vmem:[%s7 + $0x18] sm:$0xff]
  %v298 = vunpack.c.l.b16 %v290
  %v299 = vunpack.c.h.b16 %v290
  %v300 = vunpack.c.l.b16 %v291
  %v301 = vunpack.c.h.b16 %v291
  %v302 = vunpack.c.l.b16 %v292
  %v303 = vunpack.c.h.b16 %v292
  %v304 = vunpack.c.l.b16 %v293
  %v305 = vunpack.c.h.b16 %v293
  %v306 = vpack.c.b16 %v300, %v298
  %v307 = vpack.c.b16 %v301, %v299
  %v308 = vpack.c.b16 %v304, %v302
  %v309 = vpack.c.b16 %v305, %v303
  %v315 = vsel %vm56, %v289, 0
  %317 = vmatprep.subr.bf16.mxu0 %v307
  %318 = vmatpush1.bf16.msra.mxu0 %v306
  %319 = vmatprep.subr.bf16.mxu0 %v309
  %320 = vmatpush1.bf16.msra.mxu0 %v308
  %321 = vmatprep.subr.bf16.mxu0 0
  %322 = vmatpush1.bf16.msra.mxu0 0
  %323 = vmatprep.subr.bf16.mxu0 0
  %324 = vmatpush1.bf16.msra.mxu0 0
  %325 = vmatprep.subr.bf16.mxu0 0
  %326 = vmatpush1.bf16.msra.mxu0 0
  %327 = vmatprep.subr.bf16.mxu0 0
  %328 = vmatpush1.bf16.msra.mxu0 0
  %329 = vmatprep.subr.bf16.mxu0 0
  %330 = vmatpush1.bf16.msra.mxu0 0
  %331 = vmatprep.subr.bf16.mxu0 0
  %332 = vmatpush1.bf16.msra.mxu0 0
  %333 = vmatprep.subr.bf16.mxu0 0
  %334 = vmatpush1.bf16.msra.mxu0 0
  %335 = vmatprep.subr.bf16.mxu0 0
  %336 = vmatpush1.bf16.msra.mxu0 0
  %337 = vmatprep.subr.bf16.mxu0 0
  %338 = vmatpush1.bf16.msra.mxu0 0
  %339 = vmatprep.subr.bf16.mxu0 0
  %340 = vmatpush1.bf16.msra.mxu0 0
  %341 = vmatprep.subr.bf16.mxu0 0
  %342 = vmatpush1.bf16.msra.mxu0 0
  %343 = vmatprep.subr.bf16.mxu0 0
  %344 = vmatpush1.bf16.msra.mxu0 0
  %345 = vmatprep.subr.bf16.mxu0 0
  %346 = vmatpush1.bf16.msra.mxu0 0
  %347 = vmatprep.subr.bf16.mxu0 0
  %348 = vmatpush1.bf16.msra.mxu0 0
  %349 = vmatprep.mubr.bf16.mxu0 0
  %350 = vmatmul.mubr.bf16.gmra.mrb[0].mxu0 %v315
  %v351 = vpop.f32.mrb[0].mxu0
  %v352 = vadd.f32 0.0, %v351
  %v353 = vpop.f32.mrb[0].mxu0
  %v354 = vadd.f32 0.0, %v353
  %v355 = vpop.f32.mrb[0].mxu0
  %v356 = vpop.f32.mrb[0].mxu0
  %357 = vdwg.mxu0
  %v362 = vunpack.c.l.b16 %v285
  %v363 = vunpack.c.h.b16 %v285
  %v364 = vunpack.c.l.b16 %v286
  %v365 = vunpack.c.h.b16 %v286
  %v366 = vunpack.c.l.b16 %v287
  %v367 = vunpack.c.h.b16 %v287
  %v368 = vunpack.c.l.b16 %v288
  %v369 = vunpack.c.h.b16 %v288
  %v370 = vpack.c.b16 %v364, %v362
  %v371 = vpack.c.b16 %v365, %v363
  %v372 = vpack.c.b16 %v368, %v366
  %v373 = vpack.c.b16 %v369, %v367
  %v379 = vsel %vm56, %v284, 0
  %381 = vmatprep.subr.bf16.mxu0 %v371
  %382 = vmatpush1.bf16.msra.mxu0 %v370
  %383 = vmatprep.subr.bf16.mxu0 %v373
  %384 = vmatpush1.bf16.msra.mxu0 %v372
  %385 = vmatprep.subr.bf16.mxu0 0
  %386 = vmatpush1.bf16.msra.mxu0 0
  %387 = vmatprep.subr.bf16.mxu0 0
  %388 = vmatpush1.bf16.msra.mxu0 0
  %389 = vmatprep.subr.bf16.mxu0 0
  %390 = vmatpush1.bf16.msra.mxu0 0
  %391 = vmatprep.subr.bf16.mxu0 0
  %392 = vmatpush1.bf16.msra.mxu0 0
  %393 = vmatprep.subr.bf16.mxu0 0
  %394 = vmatpush1.bf16.msra.mxu0 0
  %395 = vmatprep.subr.bf16.mxu0 0
  %396 = vmatpush1.bf16.msra.mxu0 0
  %397 = vmatprep.subr.bf16.mxu0 0
  %398 = vmatpush1.bf16.msra.mxu0 0
  %399 = vmatprep.subr.bf16.mxu0 0
  %400 = vmatpush1.bf16.msra.mxu0 0
  %401 = vmatprep.subr.bf16.mxu0 0
  %402 = vmatpush1.bf16.msra.mxu0 0
  %403 = vmatprep.subr.bf16.mxu0 0
  %404 = vmatpush1.bf16.msra.mxu0 0
  %405 = vmatprep.subr.bf16.mxu0 0
  %406 = vmatpush1.bf16.msra.mxu0 0
  %407 = vmatprep.subr.bf16.mxu0 0
  %408 = vmatpush1.bf16.msra.mxu0 0
  %409 = vmatprep.subr.bf16.mxu0 0
  %410 = vmatpush1.bf16.msra.mxu0 0
  %411 = vmatprep.subr.bf16.mxu0 0
  %412 = vmatpush1.bf16.msra.mxu0 0
  %413 = vmatprep.mubr.bf16.mxu0 0
  %414 = vmatmul.mubr.bf16.gmra.mrb[0].mxu0 %v379
  %v415 = vpop.f32.mrb[0].mxu0
  %v416 = vadd.f32 %v352, %v415
  %v417 = vpop.f32.mrb[0].mxu0
  %v418 = vadd.f32 %v354, %v417
  %v419 = vpop.f32.mrb[0].mxu0
  %v420 = vpop.f32.mrb[0].mxu0
  %421 = vdwg.mxu0
  %v422 = vld [vmem:[%s8] sm:$0x3]
  %v424 = vlaneseq
  %v425 = vshrl.u32 %v424, 7
  %v426 = vsub.s32 0, %v425
  %v427 = vrot.slane %v422, %v426
  %v428 = vlaneseq
  %v429 = vshrl.u32 %v428, 7
  %v430 = vsub.s32 1, %v429
  %v431 = vrot.slane %v422, %v430
  %v434 = vadd.f32 %v416, %v427
  %v435 = vadd.f32 %v418, %v431
  %v436 = vmax.f32 %v434, 0.0
  %v437 = vmax.f32 %v435, 0.0
  %v438 = vpack.c.bf16 %v436, %v436
  %v439 = vpack.c.bf16 %v437, %v437
  %v440 = vld [vmem:[%s9] sm:$0xf]
  %v441 = vld [vmem:[%s9 + $0x4] sm:$0xf]
  %v442 = vld [vmem:[%s9 + $0x8] sm:$0xf]
  %v443 = vld [vmem:[%s9 + $0xc] sm:$0xf]
  %v444 = vld [vmem:[%s9 + $0x10] sm:$0xf]
  %v445 = vld [vmem:[%s9 + $0x14] sm:$0xf]
  %v446 = vld [vmem:[%s9 + $0x18] sm:$0xf]
  %v447 = vld [vmem:[%s9 + $0x1c] sm:$0xf]
  %v448 = vld [vmem:[%s9 + $0x20] sm:$0xf]
  %v449 = vld [vmem:[%s9 + $0x24] sm:$0xf]
  %v450 = vld [vmem:[%s9 + $0x28] sm:$0xf]
  %v451 = vld [vmem:[%s9 + $0x2c] sm:$0xf]
  %v452 = vld [vmem:[%s9 + $0x30] sm:$0xf]
  %v453 = vld [vmem:[%s9 + $0x34] sm:$0xf]
  %v454 = vld [vmem:[%s9 + $0x38] sm:$0xf]
  %v455 = vld [vmem:[%s9 + $0x3c] sm:$0xf]
  %v456 = vld [vmem:[%s9 + $0x40] sm:$0xf]
  %v457 = vld [vmem:[%s9 + $0x44] sm:$0xf]
  %v458 = vld [vmem:[%s10] sm:$0x1]
  %v460 = vlaneseq
  %v461 = vshrl.u32 %v460, 7
  %v462 = vsub.s32 0, %v461
  %v463 = vrot.slane %v458, %v462
  %v483 = vunpack.c.l.b16 %v440
  %v484 = vunpack.c.l.b16 %v441
  %v485 = vunpack.c.l.b16 %v442
  %v486 = vunpack.c.l.b16 %v443
  %v487 = vunpack.c.l.b16 %v444
  %v488 = vunpack.c.l.b16 %v445
  %v489 = vunpack.c.l.b16 %v446
  %v490 = vunpack.c.l.b16 %v447
  %v491 = vunpack.c.l.b16 %v448
  %v492 = vunpack.c.l.b16 %v449
  %v493 = vunpack.c.l.b16 %v450
  %v494 = vunpack.c.l.b16 %v451
  %v495 = vunpack.c.l.b16 %v452
  %v496 = vunpack.c.l.b16 %v453
  %v497 = vunpack.c.l.b16 %v454
  %v498 = vunpack.c.l.b16 %v455
  %v499 = vunpack.c.l.b16 %v456
  %v500 = vunpack.c.l.b16 %v457
  %v501 = vpack.c.b16 %v484, %v483
  %v502 = vpack.c.b16 %v486, %v485
  %v503 = vpack.c.b16 %v488, %v487
  %v504 = vpack.c.b16 %v490, %v489
  %v505 = vpack.c.b16 %v492, %v491
  %v506 = vpack.c.b16 %v494, %v493
  %v507 = vpack.c.b16 %v496, %v495
  %v508 = vpack.c.b16 %v498, %v497
  %v509 = vpack.c.b16 %v500, %v499
  %vm519 = vcmask 130048
  %v521 = vsel %vm519, %v439, 0
  %523 = vmatprep.subr.bf16.mxu0 0
  %524 = vmatpush1.bf16.msra.mxu0 %v501
  %525 = vmatprep.subr.bf16.mxu0 0
  %526 = vmatpush1.bf16.msra.mxu0 %v502
  %527 = vmatprep.subr.bf16.mxu0 0
  %528 = vmatpush1.bf16.msra.mxu0 %v503
  %529 = vmatprep.subr.bf16.mxu0 0
  %530 = vmatpush1.bf16.msra.mxu0 %v504
  %531 = vmatprep.subr.bf16.mxu0 0
  %532 = vmatpush1.bf16.msra.mxu0 %v505
  %533 = vmatprep.subr.bf16.mxu0 0
  %534 = vmatpush1.bf16.msra.mxu0 %v506
  %535 = vmatprep.subr.bf16.mxu0 0
  %536 = vmatpush1.bf16.msra.mxu0 %v507
  %537 = vmatprep.subr.bf16.mxu0 0
  %538 = vmatpush1.bf16.msra.mxu0 %v508
  %539 = vmatprep.subr.bf16.mxu0 0
  %540 = vmatpush1.bf16.msra.mxu0 %v509
  %541 = vmatprep.subr.bf16.mxu0 0
  %542 = vmatpush1.bf16.msra.mxu0 0
  %543 = vmatprep.subr.bf16.mxu0 0
  %544 = vmatpush1.bf16.msra.mxu0 0
  %545 = vmatprep.subr.bf16.mxu0 0
  %546 = vmatpush1.bf16.msra.mxu0 0
  %547 = vmatprep.subr.bf16.mxu0 0
  %548 = vmatpush1.bf16.msra.mxu0 0
  %549 = vmatprep.subr.bf16.mxu0 0
  %550 = vmatpush1.bf16.msra.mxu0 0
  %551 = vmatprep.subr.bf16.mxu0 0
  %552 = vmatpush1.bf16.msra.mxu0 0
  %553 = vmatprep.subr.bf16.mxu0 0
  %554 = vmatpush1.bf16.msra.mxu0 0
  %555 = vmatprep.mubr.bf16.mxu0 %v521
  %556 = vmatmul.mubr.bf16.gmra.mrb[0].mxu0 %v438
  %v557 = vpop.f32.mrb[0].mxu0
  %v558 = vadd.f32 %v463, %v557
  %v559 = vpop.f32.mrb[0].mxu0
  %v560 = vpop.f32.mrb[0].mxu0
  %v561 = vpop.f32.mrb[0].mxu0
  %562 = vdwg.mxu0
  %v563 = vmax.f32 %v558, 0.0
  %v564 = vpack.c.bf16 %v563, %v563
  %vm565 = vcmask 257024
  %566 = vst.msk [vmem:[%s11] sm:$0xf] %vm565, %v564
  // Predicated region
  $region46: #{compgcn_conve_forward.2} parent=0 // pred_check
    _
  $region47: #{compgcn_conve_forward.2} parent=0 // pred_check_branch
    %568 = sbr.rel (0) target = $region49
  $region48: #{compgcn_conve_forward.2} parent=0 // pred_region
    _
  $region49: #{compgcn_conve_forward.2} parent=0 // pred_fallthru
    _
  // Predicated region
  $region50: #{compgcn_conve_forward.2} parent=0 // pred_check
    _
  $region51: #{compgcn_conve_forward.2} parent=0 // pred_check_branch
    %570 = sbr.rel (0) target = $region53
  $region52: #{compgcn_conve_forward.2} parent=0 // pred_region
    _
  $region53: #{compgcn_conve_forward.2} parent=0 // pred_fallthru
    _

// kernel: compgcn_conve_forward.3
$region0: #{compgcn_conve_forward.3}
  #allocation0 [shape = 'u32[]', space=smem, size = 0x4, offset = 0x4, fixed_abs, tag = 'smem constant byte address 0x4 - core index']
  #allocation1 [shape = 'u32[144,128]{1,0:T(1,128)}', space=vmem, size = 0x12000, scoped, tag = 'internal scratch']
  %s0 = inlined_call_operand.vmem [shape: bf16[8,32], index: 0, kind: input, shape index: {}]
  %s1 = inlined_call_operand.vmem [shape: bf16[1024,32], index: 1, kind: input, shape index: {}]
  %s2 = inlined_call_operand.vmem [shape: bf16[32,32], index: 2, kind: input, shape index: {}]
  %s3 = inlined_call_operand.vmem [shape: bf16[32,32], index: 3, kind: input, shape index: {}]
  %s4 = inlined_call_operand.vmem [shape: f32[1,1024], index: 4, kind: input, shape index: {}]
  %s5 = inlined_call_operand.hbm [shape: f32[8,1024], index: 5, kind: output, shape index: {}]
  %s6 = sld [smem:[#allocation0]]
  $region53: #{compgcn_conve_forward.3} parent=0
    _
  %s8 = ssub.s32 1, %s6
  %s9 = scalar_select 0, %s8, %s6
  $region1: #{compgcn_conve_forward.3} parent=0
    #allocation2 [shape = 'u8[32768]{0}', space=vmem, size = 0x8000, scoped, tag = 'output window, operand 0']
    #allocation3 [shape = 's32[2]{0}', space=sflag, size = 0x8, scoped, tag = 'scoped memory for compgcn_conve_forward.3']
    %10 = vsyncpa [#allocation3], 0
    %s11 = scalar_lea.sflag [#allocation3], 1
    %12 = vsyncpa %s11, 0
    loop: start=0, step=1, limit=4
    $region2: #{compgcn_conve_forward.3} parent=1 // loop_pre_header
      _
    $region3: #{compgcn_conve_forward.3} parent=1 // loop_header
      %s14 = sphi 0, %s18
      %p15 = scmp.ge.s32.totalorder %s14, 4
      %s22 = sphi 0, %s22
      %s24 = sphi 0, %s22
      %s25 = sphi 0, %s24
      %s39 = sphi 0, %s25
      %s45 = sphi 0, %s47
      %s48 = sphi 0, %s45
      %s49 = sphi 0, %s48
      %s65 = sphi 0, %s49
      %s69 = sphi 0, %s69
      %s71 = sphi 0, %s69
      %s72 = sphi 0, %s71
      %s86 = sphi 0, %s72
      %s90 = sphi 0, %s90
      %s92 = sphi 0, %s90
      %s93 = sphi 0, %s92
      %s107 = sphi 0, %s93
      %s113 = sphi 0, %s115
      %s116 = sphi 0, %s113
      %s117 = sphi 0, %s116
      %s133 = sphi 0, %s117
      %s139 = sphi 0, %s141
      %s142 = sphi 0, %s139
      %s143 = sphi 0, %s142
      %s159 = sphi 0, %s143
    $region4: #{compgcn_conve_forward.3} parent=1 // loop_header_branch
      %17 = sbr.rel (%p15) target = $region8
    $region5: #{compgcn_conve_forward.3} parent=1 // loop_body
      %s19 = ssub.s32 %s14, 1
      %s20 = ssub.s32 %s14, 2
      %s21 = sadd.s32 %s14, 1
      %s23 = sadd.s32 %s22, 1
      %p26 = scmp.eq.s32.totalorder %s14, 1
      %p27 = scmp.ne.s32.totalorder %s22, %s24
      %p28 = scmp.eq.s32.totalorder %s14, 0
      %p29 = por %p27, %p28
      %p30 = scmp.ne.s32.totalorder %s22, %s24
      %p31 = scmp.eq.s32.totalorder %s19, 1
      %p32 = por %p30, %p31
      %p33 = scmp.ne.s32.totalorder %s24, %s25
      %p34 = scmp.eq.s32.totalorder %s19, 0
      %p35 = por %p33, %p34
      %p36 = scmp.ne.s32.totalorder %s24, %s25
      %p37 = scmp.eq.s32.totalorder %s20, 1
      %p38 = por %p36, %p37
      %p40 = scmp.ne.s32.totalorder %s25, %s39
      %p41 = scmp.eq.s32.totalorder %s20, 0
      %p42 = por %p40, %p41
      %s43 = ssub.s32 %s14, %s21
      %p44 = scmp.eq.s32.totalorder %s43, 0
      %s46 = sadd.s32 %s45, 1
      %s47 = scalar_select %p44, %s45, %s46
      %p50 = pneg %p44
      %p51 = scmp.eq.s32.totalorder %s14, 1
      %p52 = por %p50, %p51
      %p53 = scmp.ne.s32.totalorder %s45, %s48
      %p54 = scmp.eq.s32.totalorder %s14, 0
      %p55 = por %p53, %p54
      %p56 = scmp.ne.s32.totalorder %s45, %s48
      %p57 = scmp.eq.s32.totalorder %s19, 1
      %p58 = por %p56, %p57
      %p59 = scmp.ne.s32.totalorder %s48, %s49
      %p60 = scmp.eq.s32.totalorder %s19, 0
      %p61 = por %p59, %p60
      %p62 = scmp.ne.s32.totalorder %s48, %s49
      %p63 = scmp.eq.s32.totalorder %s20, 1
      %p64 = por %p62, %p63
      %p66 = scmp.ne.s32.totalorder %s49, %s65
      %p67 = scmp.eq.s32.totalorder %s20, 0
      %p68 = por %p66, %p67
      %s70 = sadd.s32 %s69, 1
      %p73 = scmp.eq.s32.totalorder %s14, 1
      %p74 = scmp.ne.s32.totalorder %s69, %s71
      %p75 = scmp.eq.s32.totalorder %s14, 0
      %p76 = por %p74, %p75
      %p77 = scmp.ne.s32.totalorder %s69, %s71
      %p78 = scmp.eq.s32.totalorder %s19, 1
      %p79 = por %p77, %p78
      %p80 = scmp.ne.s32.totalorder %s71, %s72
      %p81 = scmp.eq.s32.totalorder %s19, 0
      %p82 = por %p80, %p81
      %p83 = scmp.ne.s32.totalorder %s71, %s72
      %p84 = scmp.eq.s32.totalorder %s20, 1
      %p85 = por %p83, %p84
      %p87 = scmp.ne.s32.totalorder %s72, %s86
      %p88 = scmp.eq.s32.totalorder %s20, 0
      %p89 = por %p87, %p88
      %s91 = sadd.s32 %s90, 1
      %p94 = scmp.eq.s32.totalorder %s14, 1
      %p95 = scmp.ne.s32.totalorder %s90, %s92
      %p96 = scmp.eq.s32.totalorder %s14, 0
      %p97 = por %p95, %p96
      %p98 = scmp.ne.s32.totalorder %s90, %s92
      %p99 = scmp.eq.s32.totalorder %s19, 1
      %p100 = por %p98, %p99
      %p101 = scmp.ne.s32.totalorder %s92, %s93
      %p102 = scmp.eq.s32.totalorder %s19, 0
      %p103 = por %p101, %p102
      %p104 = scmp.ne.s32.totalorder %s92, %s93
      %p105 = scmp.eq.s32.totalorder %s20, 1
      %p106 = por %p104, %p105
      %p108 = scmp.ne.s32.totalorder %s93, %s107
      %p109 = scmp.eq.s32.totalorder %s20, 0
      %p110 = por %p108, %p109
      %s111 = ssub.s32 %s14, %s21
      %p112 = scmp.eq.s32.totalorder %s111, 0
      %s114 = sadd.s32 %s113, 1
      %s115 = scalar_select %p112, %s113, %s114
      %p118 = pneg %p112
      %p119 = scmp.eq.s32.totalorder %s14, 1
      %p120 = por %p118, %p119
      %p121 = scmp.ne.s32.totalorder %s113, %s116
      %p122 = scmp.eq.s32.totalorder %s14, 0
      %p123 = por %p121, %p122
      %p124 = scmp.ne.s32.totalorder %s113, %s116
      %p125 = scmp.eq.s32.totalorder %s19, 1
      %p126 = por %p124, %p125
      %p127 = scmp.ne.s32.totalorder %s116, %s117
      %p128 = scmp.eq.s32.totalorder %s19, 0
      %p129 = por %p127, %p128
      %p130 = scmp.ne.s32.totalorder %s116, %s117
      %p131 = scmp.eq.s32.totalorder %s20, 1
      %p132 = por %p130, %p131
      %p134 = scmp.ne.s32.totalorder %s117, %s133
      %p135 = scmp.eq.s32.totalorder %s20, 0
      %p136 = por %p134, %p135
      %s137 = ssub.s32 %s14, %s21
      %p138 = scmp.eq.s32.totalorder %s137, 0
      %s140 = sadd.s32 %s139, 1
      %s141 = scalar_select %p138, %s139, %s140
      %p144 = pneg %p138
      %p145 = scmp.eq.s32.totalorder %s14, 1
      %p146 = por %p144, %p145
      %p147 = scmp.ne.s32.totalorder %s139, %s142
      %p148 = scmp.eq.s32.totalorder %s14, 0
      %p149 = por %p147, %p148
      %p150 = scmp.ne.s32.totalorder %s139, %s142
      %p151 = scmp.eq.s32.totalorder %s19, 1
      %p152 = por %p150, %p151
      %p153 = scmp.ne.s32.totalorder %s142, %s143
      %p154 = scmp.eq.s32.totalorder %s19, 0
      %p155 = por %p153, %p154
      %p156 = scmp.ne.s32.totalorder %s142, %s143
      %p157 = scmp.eq.s32.totalorder %s20, 1
      %p158 = por %p156, %p157
      %p160 = scmp.ne.s32.totalorder %s143, %s159
      %p161 = scmp.eq.s32.totalorder %s20, 0
      %p162 = por %p160, %p161
      %p163 = scmp.le.s32.totalorder 1, %s14
      %p164 = scmp.lt.s32.totalorder %s14, 3
      %p165 = pnand %p163, %p164
      %p166 = pneg %p165
      // Predicated region
      $region9: #{compgcn_conve_forward.3} parent=5 // pred_check
        _
      $region10: #{compgcn_conve_forward.3} parent=5 // pred_check_branch
        %168 = sbr.rel (%p165) target = $region12
      $region11: #{compgcn_conve_forward.3} parent=5 // pred_region
        %s169 = ssub.s32 %s14, 1
        // Predicated region
        $region13: #{compgcn_conve_forward.3} parent=11 // pred_check
          %p170 = pneg %p35
        $region14: #{compgcn_conve_forward.3} parent=11 // pred_check_branch
          %172 = sbr.rel (%p170) target = $region16
        $region15: #{compgcn_conve_forward.3} parent=11 // pred_region
          _
        $region16: #{compgcn_conve_forward.3} parent=11 // pred_fallthru
          _
        // Predicated region
        $region17: #{compgcn_conve_forward.3} parent=11 // pred_check
          %p173 = pneg %p82
        $region18: #{compgcn_conve_forward.3} parent=11 // pred_check_branch
          %175 = sbr.rel (%p173) target = $region20
        $region19: #{compgcn_conve_forward.3} parent=11 // pred_region
          _
        $region20: #{compgcn_conve_forward.3} parent=11 // pred_fallthru
          _
        // Predicated region
        $region21: #{compgcn_conve_forward.3} parent=11 // pred_check
          %p176 = pneg %p103
        $region22: #{compgcn_conve_forward.3} parent=11 // pred_check_branch
          %178 = sbr.rel (%p176) target = $region24
        $region23: #{compgcn_conve_forward.3} parent=11 // pred_region
          _
        $region24: #{compgcn_conve_forward.3} parent=11 // pred_fallthru
          _
      $region12: #{compgcn_conve_forward.3} parent=5 // pred_fallthru
        _
      %p179 = scmp.lt.s32.totalorder %s14, 2
      // Predicated region
      $region25: #{compgcn_conve_forward.3} parent=5 // pred_check
        %p180 = pneg %p179
      $region26: #{compgcn_conve_forward.3} parent=5 // pred_check_branch
        %182 = sbr.rel (%p180) target = $region28
      $region27: #{compgcn_conve_forward.3} parent=5 // pred_region
        // Predicated region
        $region29: #{compgcn_conve_forward.3} parent=27 // pred_check
          %p183 = pneg %p55
        $region30: #{compgcn_conve_forward.3} parent=27 // pred_check_branch
          %185 = sbr.rel (%p183) target = $region32
        $region31: #{compgcn_conve_forward.3} parent=27 // pred_region
          %s186 = smul.u32 64, %s14
          %p187 = scmp.lt.s32.totalorder %s186, 127
          %s188 = scalar_select %p187, %s186, 127
          %s189 = smul.addr %s188, 4
          %s190 = scalar_lea.vmem %s1, %s189
          %s191 = smul.u32 64, %s14
        $region32: #{compgcn_conve_forward.3} parent=27 // pred_fallthru
          _
        // Predicated region
        $region33: #{compgcn_conve_forward.3} parent=27 // pred_check
          %p192 = pneg %p123
        $region34: #{compgcn_conve_forward.3} parent=27 // pred_check_branch
          %194 = sbr.rel (%p192) target = $region36
        $region35: #{compgcn_conve_forward.3} parent=27 // pred_region
          %s195 = smul.u32 4, %s14
          %p196 = scmp.lt.s32.totalorder %s195, 7
          %s197 = scalar_select %p196, %s195, 7
          %s198 = scalar_lea.vmem %s4, %s197
          %s199 = smul.u32 4, %s14
        $region36: #{compgcn_conve_forward.3} parent=27 // pred_fallthru
          _
      $region28: #{compgcn_conve_forward.3} parent=5 // pred_fallthru
        _
      %p200 = scmp.le.s32.totalorder 1, %s14
      %p201 = scmp.lt.s32.totalorder %s14, 3
      %p202 = pnand %p200, %p201
      %p203 = pneg %p202
      // Predicated region
      $region37: #{compgcn_conve_forward.3} parent=5 // pred_check
        _
      $region38: #{compgcn_conve_forward.3} parent=5 // pred_check_branch
        %205 = sbr.rel (%p202) target = $region40
      $region39: #{compgcn_conve_forward.3} parent=5 // pred_region
        %s206 = ssub.s32 %s14, 1
        %p207 = pneg %p35
        %p208 = pneg %p32
        %s209 = smul.u32 64, %s19
        %p210 = scmp.lt.s32.totalorder %s209, 127
        %s211 = scalar_select %p210, %s209, 127
        %s212 = smul.addr %s211, 4
        %s213 = scalar_lea.vmem %s1, %s212
        %p214 = pneg %p61
        %p215 = pneg %p58
        %p216 = pneg %p82
        %p217 = pneg %p79
        %p218 = pneg %p103
        %p219 = pneg %p100
        %s220 = smul.u32 4, %s19
        %p221 = scmp.lt.s32.totalorder %s220, 7
        %s222 = scalar_select %p221, %s220, 7
        %s223 = scalar_lea.vmem %s4, %s222
        %p224 = pneg %p129
        %p225 = pneg %p126
        %p226 = pneg %p155
        %p227 = pneg %p152
        %s228 = sand.u32 %s142, 1
        %s229 = scalar_lea.sflag [#allocation3], %s228
        %s230 = sand.u32 %s142, 1
        %s231 = smul.addr %s230, 32
        %s232 = scalar_lea.vmem [#allocation2], %s231
        %s233 = smul.u32 64, %s19
        %p234 = scmp.lt.s32.totalorder %s233, 127
        %s235 = scalar_select %p234, %s233, 127
        %s236 = smul.addr %s235, 4
        %s237 = scalar_lea.vmem %s1, %s236
        %s238 = smul.u32 64, %s19
        %s239 = smul.u32 4, %s19
        %p240 = scmp.lt.s32.totalorder %s239, 7
        %s241 = scalar_select %p240, %s239, 7
        %s242 = scalar_lea.vmem %s4, %s241
        %s243 = smul.u32 4, %s19
        %s244 = smul.u32 4, %s19
        %v246 = vld [vmem:[%s237] sm:$0xf]
        %v247 = vld [vmem:[%s237 + $0x4] sm:$0xf]
        %v248 = vld [vmem:[%s237 + $0x8] sm:$0xf]
        %v249 = vld [vmem:[%s237 + $0xc] sm:$0xf]
        %v250 = vld [vmem:[%s237 + $0x10] sm:$0xf]
        %v251 = vld [vmem:[%s237 + $0x14] sm:$0xf]
        %v252 = vld [vmem:[%s237 + $0x18] sm:$0xf]
        %v253 = vld [vmem:[%s237 + $0x1c] sm:$0xf]
        %v254 = vld [vmem:[%s237 + $0x20] sm:$0xf]
        %v255 = vld [vmem:[%s237 + $0x24] sm:$0xf]
        %v256 = vld [vmem:[%s237 + $0x28] sm:$0xf]
        %v257 = vld [vmem:[%s237 + $0x2c] sm:$0xf]
        %v258 = vld [vmem:[%s237 + $0x30] sm:$0xf]
        %v259 = vld [vmem:[%s237 + $0x34] sm:$0xf]
        %v260 = vld [vmem:[%s237 + $0x38] sm:$0xf]
        %v261 = vld [vmem:[%s237 + $0x3c] sm:$0xf]
        %v262 = vld [vmem:[%s237 + $0x40] sm:$0xf]
        %v263 = vld [vmem:[%s237 + $0x44] sm:$0xf]
        %v264 = vld [vmem:[%s237 + $0x48] sm:$0xf]
        %v265 = vld [vmem:[%s237 + $0x4c] sm:$0xf]
        %v266 = vld [vmem:[%s237 + $0x50] sm:$0xf]
        %v267 = vld [vmem:[%s237 + $0x54] sm:$0xf]
        %v268 = vld [vmem:[%s237 + $0x58] sm:$0xf]
        %v269 = vld [vmem:[%s237 + $0x5c] sm:$0xf]
        %v270 = vld [vmem:[%s237 + $0x60] sm:$0xf]
        %v271 = vld [vmem:[%s237 + $0x64] sm:$0xf]
        %v272 = vld [vmem:[%s237 + $0x68] sm:$0xf]
        %v273 = vld [vmem:[%s237 + $0x6c] sm:$0xf]
        %v274 = vld [vmem:[%s237 + $0x70] sm:$0xf]
        %v275 = vld [vmem:[%s237 + $0x74] sm:$0xf]
        %v276 = vld [vmem:[%s237 + $0x78] sm:$0xf]
        %v277 = vld [vmem:[%s237 + $0x7c] sm:$0xf]
        %v278 = vld [vmem:[%s237 + $0x80] sm:$0xf]
        %v279 = vld [vmem:[%s237 + $0x84] sm:$0xf]
        %v280 = vld [vmem:[%s237 + $0x88] sm:$0xf]
        %v281 = vld [vmem:[%s237 + $0x8c] sm:$0xf]
        %v282 = vld [vmem:[%s237 + $0x90] sm:$0xf]
        %v283 = vld [vmem:[%s237 + $0x94] sm:$0xf]
        %v284 = vld [vmem:[%s237 + $0x98] sm:$0xf]
        %v285 = vld [vmem:[%s237 + $0x9c] sm:$0xf]
        %v286 = vld [vmem:[%s237 + $0xa0] sm:$0xf]
        %v287 = vld [vmem:[%s237 + $0xa4] sm:$0xf]
        %v288 = vld [vmem:[%s237 + $0xa8] sm:$0xf]
        %v289 = vld [vmem:[%s237 + $0xac] sm:$0xf]
        %v290 = vld [vmem:[%s237 + $0xb0] sm:$0xf]
        %v291 = vld [vmem:[%s237 + $0xb4] sm:$0xf]
        %v292 = vld [vmem:[%s237 + $0xb8] sm:$0xf]
        %v293 = vld [vmem:[%s237 + $0xbc] sm:$0xf]
        %v294 = vld [vmem:[%s237 + $0xc0] sm:$0xf]
        %v295 = vld [vmem:[%s237 + $0xc4] sm:$0xf]
        %v296 = vld [vmem:[%s237 + $0xc8] sm:$0xf]
        %v297 = vld [vmem:[%s237 + $0xcc] sm:$0xf]
        %v298 = vld [vmem:[%s237 + $0xd0] sm:$0xf]
        %v299 = vld [vmem:[%s237 + $0xd4] sm:$0xf]
        %v300 = vld [vmem:[%s237 + $0xd8] sm:$0xf]
        %v301 = vld [vmem:[%s237 + $0xdc] sm:$0xf]
        %v302 = vld [vmem:[%s237 + $0xe0] sm:$0xf]
        %v303 = vld [vmem:[%s237 + $0xe4] sm:$0xf]
        %v304 = vld [vmem:[%s237 + $0xe8] sm:$0xf]
        %v305 = vld [vmem:[%s237 + $0xec] sm:$0xf]
        %v306 = vld [vmem:[%s237 + $0xf0] sm:$0xf]
        %v307 = vld [vmem:[%s237 + $0xf4] sm:$0xf]
        %v308 = vld [vmem:[%s237 + $0xf8] sm:$0xf]
        %v309 = vld [vmem:[%s237 + $0xfc] sm:$0xf]
        %v310 = vld [vmem:[%s2] sm:$0xf]
        %v311 = vld [vmem:[%s2 + $0x4] sm:$0xf]
        %v312 = vld [vmem:[%s2 + $0x8] sm:$0xf]
        %v313 = vld [vmem:[%s2 + $0xc] sm:$0xf]
        %v378 = vunpack.c.l.b16 %v246
        %v379 = vunpack.c.l.b16 %v247
        %v380 = vunpack.c.l.b16 %v248
        %v381 = vunpack.c.l.b16 %v249
        %v382 = vunpack.c.l.b16 %v250
        %v383 = vunpack.c.l.b16 %v251
        %v384 = vunpack.c.l.b16 %v252
        %v385 = vunpack.c.l.b16 %v253
        %v386 = vunpack.c.l.b16 %v254
        %v387 = vunpack.c.l.b16 %v255
        %v388 = vunpack.c.l.b16 %v256
        %v389 = vunpack.c.l.b16 %v257
        %v390 = vunpack.c.l.b16 %v258
        %v391 = vunpack.c.l.b16 %v259
        %v392 = vunpack.c.l.b16 %v260
        %v393 = vunpack.c.l.b16 %v261
        %v394 = vunpack.c.l.b16 %v262
        %v395 = vunpack.c.l.b16 %v263
        %v396 = vunpack.c.l.b16 %v264
        %v397 = vunpack.c.l.b16 %v265
        %v398 = vunpack.c.l.b16 %v266
        %v399 = vunpack.c.l.b16 %v267
        %v400 = vunpack.c.l.b16 %v268
        %v401 = vunpack.c.l.b16 %v269
        %v402 = vunpack.c.l.b16 %v270
        %v403 = vunpack.c.l.b16 %v271
        %v404 = vunpack.c.l.b16 %v272
        %v405 = vunpack.c.l.b16 %v273
        %v406 = vunpack.c.l.b16 %v274
        %v407 = vunpack.c.l.b16 %v275
        %v408 = vunpack.c.l.b16 %v276
        %v409 = vunpack.c.l.b16 %v277
        %v410 = vunpack.c.l.b16 %v278
        %v411 = vunpack.c.l.b16 %v279
        %v412 = vunpack.c.l.b16 %v280
        %v413 = vunpack.c.l.b16 %v281
        %v414 = vunpack.c.l.b16 %v282
        %v415 = vunpack.c.l.b16 %v283
        %v416 = vunpack.c.l.b16 %v284
        %v417 = vunpack.c.l.b16 %v285
        %v418 = vunpack.c.l.b16 %v286
        %v419 = vunpack.c.l.b16 %v287
        %v420 = vunpack.c.l.b16 %v288
        %v421 = vunpack.c.l.b16 %v289
        %v422 = vunpack.c.l.b16 %v290
        %v423 = vunpack.c.l.b16 %v291
        %v424 = vunpack.c.l.b16 %v292
        %v425 = vunpack.c.l.b16 %v293
        %v426 = vunpack.c.l.b16 %v294
        %v427 = vunpack.c.l.b16 %v295
        %v428 = vunpack.c.l.b16 %v296
        %v429 = vunpack.c.l.b16 %v297
        %v430 = vunpack.c.l.b16 %v298
        %v431 = vunpack.c.l.b16 %v299
        %v432 = vunpack.c.l.b16 %v300
        %v433 = vunpack.c.l.b16 %v301
        %v434 = vunpack.c.l.b16 %v302
        %v435 = vunpack.c.l.b16 %v303
        %v436 = vunpack.c.l.b16 %v304
        %v437 = vunpack.c.l.b16 %v305
        %v438 = vunpack.c.l.b16 %v306
        %v439 = vunpack.c.l.b16 %v307
        %v440 = vunpack.c.l.b16 %v308
        %v441 = vunpack.c.l.b16 %v309
        %v442 = vpack.c.b16 %v379, %v378
        %v443 = vpack.c.b16 %v381, %v380
        %v444 = vpack.c.b16 %v383, %v382
        %v445 = vpack.c.b16 %v385, %v384
        %v446 = vpack.c.b16 %v387, %v386
        %v447 = vpack.c.b16 %v389, %v388
        %v448 = vpack.c.b16 %v391, %v390
        %v449 = vpack.c.b16 %v393, %v392
        %v450 = vpack.c.b16 %v395, %v394
        %v451 = vpack.c.b16 %v397, %v396
        %v452 = vpack.c.b16 %v399, %v398
        %v453 = vpack.c.b16 %v401, %v400
        %v454 = vpack.c.b16 %v403, %v402
        %v455 = vpack.c.b16 %v405, %v404
        %v456 = vpack.c.b16 %v407, %v406
        %v457 = vpack.c.b16 %v409, %v408
        %v458 = vpack.c.b16 %v411, %v410
        %v459 = vpack.c.b16 %v413, %v412
        %v460 = vpack.c.b16 %v415, %v414
        %v461 = vpack.c.b16 %v417, %v416
        %v462 = vpack.c.b16 %v419, %v418
        %v463 = vpack.c.b16 %v421, %v420
        %v464 = vpack.c.b16 %v423, %v422
        %v465 = vpack.c.b16 %v425, %v424
        %v466 = vpack.c.b16 %v427, %v426
        %v467 = vpack.c.b16 %v429, %v428
        %v468 = vpack.c.b16 %v431, %v430
        %v469 = vpack.c.b16 %v433, %v432
        %v470 = vpack.c.b16 %v435, %v434
        %v471 = vpack.c.b16 %v437, %v436
        %v472 = vpack.c.b16 %v439, %v438
        %v473 = vpack.c.b16 %v441, %v440
        %v478 = vunpack.c.l.b16 %v310
        %v479 = vunpack.c.l.b16 %v311
        %v480 = vunpack.c.l.b16 %v312
        %v481 = vunpack.c.l.b16 %v313
        %v482 = vpack.c.b16 %v479, %v478
        %v483 = vpack.c.b16 %v481, %v480
        %vm486 = vcmask 261120
        %v488 = vsel %vm486, %v442, 0
        %v491 = vsel %vm486, %v443, 0
        %v494 = vsel %vm486, %v444, 0
        %v497 = vsel %vm486, %v445, 0
        %v500 = vsel %vm486, %v446, 0
        %v503 = vsel %vm486, %v447, 0
        %v506 = vsel %vm486, %v448, 0
        %v509 = vsel %vm486, %v449, 0
        %v512 = vsel %vm486, %v450, 0
        %v515 = vsel %vm486, %v451, 0
        %v518 = vsel %vm486, %v452, 0
        %v521 = vsel %vm486, %v453, 0
        %v524 = vsel %vm486, %v454, 0
        %v527 = vsel %vm486, %v455, 0
        %v530 = vsel %vm486, %v456, 0
        %v533 = vsel %vm486, %v457, 0
        %v536 = vsel %vm486, %v458, 0
        %v539 = vsel %vm486, %v459, 0
        %v542 = vsel %vm486, %v460, 0
        %v545 = vsel %vm486, %v461, 0
        %v548 = vsel %vm486, %v462, 0
        %v551 = vsel %vm486, %v463, 0
        %v554 = vsel %vm486, %v464, 0
        %v557 = vsel %vm486, %v465, 0
        %v560 = vsel %vm486, %v466, 0
        %v563 = vsel %vm486, %v467, 0
        %v566 = vsel %vm486, %v468, 0
        %v569 = vsel %vm486, %v469, 0
        %v572 = vsel %vm486, %v470, 0
        %v575 = vsel %vm486, %v471, 0
        %v578 = vsel %vm486, %v472, 0
        %v581 = vsel %vm486, %v473, 0
        %583 = vmatprep.subr.bf16.mxu0 0
        %584 = vmatpush1.bf16.msra.mxu0 %v482
        %585 = vmatprep.subr.bf16.mxu0 0
        %586 = vmatpush1.bf16.msra.mxu0 %v483
        %587 = vmatprep.subr.bf16.mxu0 0
        %588 = vmatpush1.bf16.msra.mxu0 0
        %589 = vmatprep.subr.bf16.mxu0 0
        %590 = vmatpush1.bf16.msra.mxu0 0
        %591 = vmatprep.subr.bf16.mxu0 0
        %592 = vmatpush1.bf16.msra.mxu0 0
        %593 = vmatprep.subr.bf16.mxu0 0
        %594 = vmatpush1.bf16.msra.mxu0 0
        %595 = vmatprep.subr.bf16.mxu0 0
        %596 = vmatpush1.bf16.msra.mxu0 0
        %597 = vmatprep.subr.bf16.mxu0 0
        %598 = vmatpush1.bf16.msra.mxu0 0
        %599 = vmatprep.subr.bf16.mxu0 0
        %600 = vmatpush1.bf16.msra.mxu0 0
        %601 = vmatprep.subr.bf16.mxu0 0
        %602 = vmatpush1.bf16.msra.mxu0 0
        %603 = vmatprep.subr.bf16.mxu0 0
        %604 = vmatpush1.bf16.msra.mxu0 0
        %605 = vmatprep.subr.bf16.mxu0 0
        %606 = vmatpush1.bf16.msra.mxu0 0
        %607 = vmatprep.subr.bf16.mxu0 0
        %608 = vmatpush1.bf16.msra.mxu0 0
        %609 = vmatprep.subr.bf16.mxu0 0
        %610 = vmatpush1.bf16.msra.mxu0 0
        %611 = vmatprep.subr.bf16.mxu0 0
        %612 = vmatpush1.bf16.msra.mxu0 0
        %613 = vmatprep.subr.bf16.mxu0 0
        %614 = vmatpush1.bf16.msra.mxu0 0
        %615 = vmatprep.mubr.bf16.mxu0 0
        %616 = vmatmul.mubr.bf16.gmra.mrb[0].mxu0 %v488
        %v617 = vpop.f32.mrb[0].mxu0
        %v618 = vadd.f32 0.0, %v617
        %v619 = vpop.f32.mrb[0].mxu0
        %v620 = vpop.f32.mrb[0].mxu0
        %v621 = vadd.f32 0.0, %v620
        %v622 = vpop.f32.mrb[0].mxu0
        %623 = vmatprep.mubr.bf16.mxu0 0
        %624 = vmatmul.mubr.bf16.gmra.mrb[0].mxu0 %v491
        %v625 = vpop.f32.mrb[0].mxu0
        %v626 = vadd.f32 0.0, %v625
        %v627 = vpop.f32.mrb[0].mxu0
        %v628 = vpop.f32.mrb[0].mxu0
        %v629 = vadd.f32 0.0, %v628
        %v630 = vpop.f32.mrb[0].mxu0
        %631 = vmatprep.mubr.bf16.mxu0 0
        %632 = vmatmul.mubr.bf16.gmra.mrb[0].mxu0 %v494
        %v633 = vpop.f32.mrb[0].mxu0
        %v634 = vadd.f32 0.0, %v633
        %v635 = vpop.f32.mrb[0].mxu0
        %v636 = vpop.f32.mrb[0].mxu0
        %v637 = vadd.f32 0.0, %v636
        %v638 = vpop.f32.mrb[0].mxu0
        %639 = vmatprep.mubr.bf16.mxu0 0
        %640 = vmatmul.mubr.bf16.gmra.mrb[0].mxu0 %v497
        %v641 = vpop.f32.mrb[0].mxu0
        %v642 = vadd.f32 0.0, %v641
        %v643 = vpop.f32.mrb[0].mxu0
        %v644 = vpop.f32.mrb[0].mxu0
        %v645 = vadd.f32 0.0, %v644
        %v646 = vpop.f32.mrb[0].mxu0
        %647 = vmatprep.mubr.bf16.mxu0 0
        %648 = vmatmul.mubr.bf16.gmra.mrb[0].mxu0 %v500
        %v649 = vpop.f32.mrb[0].mxu0
        %v650 = vadd.f32 0.0, %v649
        %v651 = vpop.f32.mrb[0].mxu0
        %v652 = vpop.f32.mrb[0].mxu0
        %v653 = vadd.f32 0.0, %v652
        %v654 = vpop.f32.mrb[0].mxu0
        %655 = vmatprep.mubr.bf16.mxu0 0
        %656 = vmatmul.mubr.bf16.gmra.mrb[0].mxu0 %v503
        %v657 = vpop.f32.mrb[0].mxu0
        %v658 = vadd.f32 0.0, %v657
        %v659 = vpop.f32.mrb[0].mxu0
        %v660 = vpop.f32.mrb[0].mxu0
        %v661 = vadd.f32 0.0, %v660
        %v662 = vpop.f32.mrb[0].mxu0
        %663 = vmatprep.mubr.bf16.mxu0 0
        %664 = vmatmul.mubr.bf16.gmra.mrb[0].mxu0 %v506
        %v665 = vpop.f32.mrb[0].mxu0
        %v666 = vadd.f32 0.0, %v665
        %v667 = vpop.f32.mrb[0].mxu0
        %v668 = vpop.f32.mrb[0].mxu0
        %v669 = vadd.f32 0.0, %v668
        %v670 = vpop.f32.mrb[0].mxu0
        %671 = vmatprep.mubr.bf16.mxu0 0
        %672 = vmatmul.mubr.bf16.gmra.mrb[0].mxu0 %v509
        %v673 = vpop.f32.mrb[0].mxu0
        %v674 = vadd.f32 0.0, %v673
        %v675 = vpop.f32.mrb[0].mxu0
        %v676 = vpop.f32.mrb[0].mxu0
        %v677 = vadd.f32 0.0, %v676
        %v678 = vpop.f32.mrb[0].mxu0
        %679 = vmatprep.mubr.bf16.mxu0 0
        %680 = vmatmul.mubr.bf16.gmra.mrb[0].mxu0 %v512
        %v681 = vpop.f32.mrb[0].mxu0
        %v682 = vadd.f32 0.0, %v681
        %v683 = vpop.f32.mrb[0].mxu0
        %v684 = vpop.f32.mrb[0].mxu0
        %v685 = vadd.f32 0.0, %v684
        %v686 = vpop.f32.mrb[0].mxu0
        %687 = vmatprep.mubr.bf16.mxu0 0
        %688 = vmatmul.mubr.bf16.gmra.mrb[0].mxu0 %v515
        %v689 = vpop.f32.mrb[0].mxu0
        %v690 = vadd.f32 0.0, %v689
        %v691 = vpop.f32.mrb[0].mxu0
        %v692 = vpop.f32.mrb[0].mxu0
        %v693 = vadd.f32 0.0, %v692
        %v694 = vpop.f32.mrb[0].mxu0
        %695 = vmatprep.mubr.bf16.mxu0 0
        %696 = vmatmul.mubr.bf16.gmra.mrb[0].mxu0 %v518
        %v697 = vpop.f32.mrb[0].mxu0
        %v698 = vadd.f32 0.0, %v697
        %v699 = vpop.f32.mrb[0].mxu0
        %v700 = vpop.f32.mrb[0].mxu0
        %v701 = vadd.f32 0.0, %v700
        %v702 = vpop.f32.mrb[0].mxu0
        %703 = vmatprep.mubr.bf16.mxu0 0
        %704 = vmatmul.mubr.bf16.gmra.mrb[0].mxu0 %v521
        %v705 = vpop.f32.mrb[0].mxu0
        %v706 = vadd.f32 0.0, %v705
        %v707 = vpop.f32.mrb[0].mxu0
        %v708 = vpop.f32.mrb[0].mxu0
        %v709 = vadd.f32 0.0, %v708
        %v710 = vpop.f32.mrb[0].mxu0
        %711 = vmatprep.mubr.bf16.mxu0 0
        %712 = vmatmul.mubr.bf16.gmra.mrb[0].mxu0 %v524
        %v713 = vpop.f32.mrb[0].mxu0
        %v714 = vadd.f32 0.0, %v713
        %v715 = vpop.f32.mrb[0].mxu0
        %v716 = vpop.f32.mrb[0].mxu0
        %v717 = vadd.f32 0.0, %v716
        %v718 = vpop.f32.mrb[0].mxu0
        %719 = vmatprep.mubr.bf16.mxu0 0
        %720 = vmatmul.mubr.bf16.gmra.mrb[0].mxu0 %v527
        %v721 = vpop.f32.mrb[0].mxu0
        %v722 = vadd.f32 0.0, %v721
        %v723 = vpop.f32.mrb[0].mxu0
        %v724 = vpop.f32.mrb[0].mxu0
        %v725 = vadd.f32 0.0, %v724
        %v726 = vpop.f32.mrb[0].mxu0
        %727 = vmatprep.mubr.bf16.mxu0 0
        %728 = vmatmul.mubr.bf16.gmra.mrb[0].mxu0 %v530
        %v729 = vpop.f32.mrb[0].mxu0
        %v730 = vadd.f32 0.0, %v729
        %v731 = vpop.f32.mrb[0].mxu0
        %v732 = vpop.f32.mrb[0].mxu0
        %v733 = vadd.f32 0.0, %v732
        %v734 = vpop.f32.mrb[0].mxu0
        %735 = vmatprep.mubr.bf16.mxu0 0
        %736 = vmatmul.mubr.bf16.gmra.mrb[0].mxu0 %v533
        %v737 = vpop.f32.mrb[0].mxu0
        %v738 = vadd.f32 0.0, %v737
        %v739 = vpop.f32.mrb[0].mxu0
        %v740 = vpop.f32.mrb[0].mxu0
        %v741 = vadd.f32 0.0, %v740
        %v742 = vpop.f32.mrb[0].mxu0
        %743 = vmatprep.mubr.bf16.mxu0 0
        %744 = vmatmul.mubr.bf16.gmra.mrb[0].mxu0 %v536
        %v745 = vpop.f32.mrb[0].mxu0
        %v746 = vadd.f32 0.0, %v745
        %v747 = vpop.f32.mrb[0].mxu0
        %v748 = vpop.f32.mrb[0].mxu0
        %v749 = vadd.f32 0.0, %v748
        %v750 = vpop.f32.mrb[0].mxu0
        %751 = vmatprep.mubr.bf16.mxu0 0
        %752 = vmatmul.mubr.bf16.gmra.mrb[0].mxu0 %v539
        %v753 = vpop.f32.mrb[0].mxu0
        %v754 = vadd.f32 0.0, %v753
        %v755 = vpop.f32.mrb[0].mxu0
        %v756 = vpop.f32.mrb[0].mxu0
        %v757 = vadd.f32 0.0, %v756
        %v758 = vpop.f32.mrb[0].mxu0
        %759 = vmatprep.mubr.bf16.mxu0 0
        %760 = vmatmul.mubr.bf16.gmra.mrb[0].mxu0 %v542
        %v761 = vpop.f32.mrb[0].mxu0
        %v762 = vadd.f32 0.0, %v761
        %v763 = vpop.f32.mrb[0].mxu0
        %v764 = vpop.f32.mrb[0].mxu0
        %v765 = vadd.f32 0.0, %v764
        %v766 = vpop.f32.mrb[0].mxu0
        %767 = vmatprep.mubr.bf16.mxu0 0
        %768 = vmatmul.mubr.bf16.gmra.mrb[0].mxu0 %v545
        %v769 = vpop.f32.mrb[0].mxu0
        %v770 = vadd.f32 0.0, %v769
        %v771 = vpop.f32.mrb[0].mxu0
        %v772 = vpop.f32.mrb[0].mxu0
        %v773 = vadd.f32 0.0, %v772
        %v774 = vpop.f32.mrb[0].mxu0
        %775 = vmatprep.mubr.bf16.mxu0 0
        %776 = vmatmul.mubr.bf16.gmra.mrb[0].mxu0 %v548
        %v777 = vpop.f32.mrb[0].mxu0
        %v778 = vadd.f32 0.0, %v777
        %v779 = vpop.f32.mrb[0].mxu0
        %v780 = vpop.f32.mrb[0].mxu0
        %v781 = vadd.f32 0.0, %v780
        %v782 = vpop.f32.mrb[0].mxu0
        %783 = vmatprep.mubr.bf16.mxu0 0
        %784 = vmatmul.mubr.bf16.gmra.mrb[0].mxu0 %v551
        %v785 = vpop.f32.mrb[0].mxu0
        %v786 = vadd.f32 0.0, %v785
        %v787 = vpop.f32.mrb[0].mxu0
        %v788 = vpop.f32.mrb[0].mxu0
        %v789 = vadd.f32 0.0, %v788
        %v790 = vpop.f32.mrb[0].mxu0
        %791 = vmatprep.mubr.bf16.mxu0 0
        %792 = vmatmul.mubr.bf16.gmra.mrb[0].mxu0 %v554
        %v793 = vpop.f32.mrb[0].mxu0
        %v794 = vadd.f32 0.0, %v793
        %v795 = vpop.f32.mrb[0].mxu0
        %v796 = vpop.f32.mrb[0].mxu0
        %v797 = vadd.f32 0.0, %v796
        %v798 = vpop.f32.mrb[0].mxu0
        %799 = vmatprep.mubr.bf16.mxu0 0
        %800 = vmatmul.mubr.bf16.gmra.mrb[0].mxu0 %v557
        %v801 = vpop.f32.mrb[0].mxu0
        %v802 = vadd.f32 0.0, %v801
        %v803 = vpop.f32.mrb[0].mxu0
        %v804 = vpop.f32.mrb[0].mxu0
        %v805 = vadd.f32 0.0, %v804
        %v806 = vpop.f32.mrb[0].mxu0
        %807 = vmatprep.mubr.bf16.mxu0 0
        %808 = vmatmul.mubr.bf16.gmra.mrb[0].mxu0 %v560
        %v809 = vpop.f32.mrb[0].mxu0
        %v810 = vadd.f32 0.0, %v809
        %v811 = vpop.f32.mrb[0].mxu0
        %v812 = vpop.f32.mrb[0].mxu0
        %v813 = vadd.f32 0.0, %v812
        %v814 = vpop.f32.mrb[0].mxu0
        %815 = vmatprep.mubr.bf16.mxu0 0
        %816 = vmatmul.mubr.bf16.gmra.mrb[0].mxu0 %v563
        %v817 = vpop.f32.mrb[0].mxu0
        %v818 = vadd.f32 0.0, %v817
        %v819 = vpop.f32.mrb[0].mxu0
        %v820 = vpop.f32.mrb[0].mxu0
        %v821 = vadd.f32 0.0, %v820
        %v822 = vpop.f32.mrb[0].mxu0
        %823 = vmatprep.mubr.bf16.mxu0 0
        %824 = vmatmul.mubr.bf16.gmra.mrb[0].mxu0 %v566
        %v825 = vpop.f32.mrb[0].mxu0
        %v826 = vadd.f32 0.0, %v825
        %v827 = vpop.f32.mrb[0].mxu0
        %v828 = vpop.f32.mrb[0].mxu0
        %v829 = vadd.f32 0.0, %v828
        %v830 = vpop.f32.mrb[0].mxu0
        %831 = vmatprep.mubr.bf16.mxu0 0
        %832 = vmatmul.mubr.bf16.gmra.mrb[0].mxu0 %v569
        %v833 = vpop.f32.mrb[0].mxu0
        %v834 = vadd.f32 0.0, %v833
        %v835 = vpop.f32.mrb[0].mxu0
        %v836 = vpop.f32.mrb[0].mxu0
        %v837 = vadd.f32 0.0, %v836
        %v838 = vpop.f32.mrb[0].mxu0
        %839 = vmatprep.mubr.bf16.mxu0 0
        %840 = vmatmul.mubr.bf16.gmra.mrb[0].mxu0 %v572
        %v841 = vpop.f32.mrb[0].mxu0
        %v842 = vadd.f32 0.0, %v841
        %v843 = vpop.f32.mrb[0].mxu0
        %v844 = vpop.f32.mrb[0].mxu0
        %v845 = vadd.f32 0.0, %v844
        %v846 = vpop.f32.mrb[0].mxu0
        %847 = vmatprep.mubr.bf16.mxu0 0
        %848 = vmatmul.mubr.bf16.gmra.mrb[0].mxu0 %v575
        %v849 = vpop.f32.mrb[0].mxu0
        %v850 = vadd.f32 0.0, %v849
        %v851 = vpop.f32.mrb[0].mxu0
        %v852 = vpop.f32.mrb[0].mxu0
        %v853 = vadd.f32 0.0, %v852
        %v854 = vpop.f32.mrb[0].mxu0
        %855 = vmatprep.mubr.bf16.mxu0 0
        %856 = vmatmul.mubr.bf16.gmra.mrb[0].mxu0 %v578
        %v857 = vpop.f32.mrb[0].mxu0
        %v858 = vadd.f32 0.0, %v857
        %v859 = vpop.f32.mrb[0].mxu0
        %v860 = vpop.f32.mrb[0].mxu0
        %v861 = vadd.f32 0.0, %v860
        %v862 = vpop.f32.mrb[0].mxu0
        %863 = vmatprep.mubr.bf16.mxu0 0
        %864 = vmatmul.mubr.bf16.gmra.mrb[0].mxu0 %v581
        %v865 = vpop.f32.mrb[0].mxu0
        %v866 = vadd.f32 0.0, %v865
        %v867 = vpop.f32.mrb[0].mxu0
        %v868 = vpop.f32.mrb[0].mxu0
        %v869 = vadd.f32 0.0, %v868
        %v870 = vpop.f32.mrb[0].mxu0
        %871 = vdwg.mxu0
        %v872 = vtanh.pop %v618
        %v873 = vtanh.pop %v621
        %v874 = vtanh.pop %v626
        %v875 = vtanh.pop %v629
        %v876 = vtanh.pop %v634
        %v877 = vtanh.pop %v637
        %v878 = vtanh.pop %v642
        %v879 = vtanh.pop %v645
        %v880 = vtanh.pop %v650
        %v881 = vtanh.pop %v653
        %v882 = vtanh.pop %v658
        %v883 = vtanh.pop %v661
        %v884 = vtanh.pop %v666
        %v885 = vtanh.pop %v669
        %v886 = vtanh.pop %v674
        %v887 = vtanh.pop %v677
        %v888 = vtanh.pop %v682
        %v889 = vtanh.pop %v685
        %v890 = vtanh.pop %v690
        %v891 = vtanh.pop %v693
        %v892 = vtanh.pop %v698
        %v893 = vtanh.pop %v701
        %v894 = vtanh.pop %v706
        %v895 = vtanh.pop %v709
        %v896 = vtanh.pop %v714
        %v897 = vtanh.pop %v717
        %v898 = vtanh.pop %v722
        %v899 = vtanh.pop %v725
        %v900 = vtanh.pop %v730
        %v901 = vtanh.pop %v733
        %v902 = vtanh.pop %v738
        %v903 = vtanh.pop %v741
        %v904 = vtanh.pop %v746
        %v905 = vtanh.pop %v749
        %v906 = vtanh.pop %v754
        %v907 = vtanh.pop %v757
        %v908 = vtanh.pop %v762
        %v909 = vtanh.pop %v765
        %v910 = vtanh.pop %v770
        %v911 = vtanh.pop %v773
        %v912 = vtanh.pop %v778
        %v913 = vtanh.pop %v781
        %v914 = vtanh.pop %v786
        %v915 = vtanh.pop %v789
        %v916 = vtanh.pop %v794
        %v917 = vtanh.pop %v797
        %v918 = vtanh.pop %v802
        %v919 = vtanh.pop %v805
        %v920 = vtanh.pop %v810
        %v921 = vtanh.pop %v813
        %v922 = vtanh.pop %v818
        %v923 = vtanh.pop %v821
        %v924 = vtanh.pop %v826
        %v925 = vtanh.pop %v829
        %v926 = vtanh.pop %v834
        %v927 = vtanh.pop %v837
        %v928 = vtanh.pop %v842
        %v929 = vtanh.pop %v845
        %v930 = vtanh.pop %v850
        %v931 = vtanh.pop %v853
        %v932 = vtanh.pop %v858
        %v933 = vtanh.pop %v861
        %v934 = vtanh.pop %v866
        %v935 = vtanh.pop %v869
        %v936 = vpack.c.bf16 %v873, %v872
        %v937 = vpack.c.bf16 %v875, %v874
        %v938 = vpack.c.bf16 %v877, %v876
        %v939 = vpack.c.bf16 %v879, %v878
        %v940 = vpack.c.bf16 %v881, %v880
        %v941 = vpack.c.bf16 %v883, %v882
        %v942 = vpack.c.bf16 %v885, %v884
        %v943 = vpack.c.bf16 %v887, %v886
        %v944 = vpack.c.bf16 %v889, %v888
        %v945 = vpack.c.bf16 %v891, %v890
        %v946 = vpack.c.bf16 %v893, %v892
        %v947 = vpack.c.bf16 %v895, %v894
        %v948 = vpack.c.bf16 %v897, %v896
        %v949 = vpack.c.bf16 %v899, %v898
        %v950 = vpack.c.bf16 %v901, %v900
        %v951 = vpack.c.bf16 %v903, %v902
        %v952 = vpack.c.bf16 %v905, %v904
        %v953 = vpack.c.bf16 %v907, %v906
        %v954 = vpack.c.bf16 %v909, %v908
        %v955 = vpack.c.bf16 %v911, %v910
        %v956 = vpack.c.bf16 %v913, %v912
        %v957 = vpack.c.bf16 %v915, %v914
        %v958 = vpack.c.bf16 %v917, %v916
        %v959 = vpack.c.bf16 %v919, %v918
        %v960 = vpack.c.bf16 %v921, %v920
        %v961 = vpack.c.bf16 %v923, %v922
        %v962 = vpack.c.bf16 %v925, %v924
        %v963 = vpack.c.bf16 %v927, %v926
        %v964 = vpack.c.bf16 %v929, %v928
        %v965 = vpack.c.bf16 %v931, %v930
        %v966 = vpack.c.bf16 %v933, %v932
        %v967 = vpack.c.bf16 %v935, %v934
        %v968 = vld [vmem:[%s3] sm:$0xf]
        %v969 = vld [vmem:[%s3 + $0x4] sm:$0xf]
        %v970 = vld [vmem:[%s3 + $0x8] sm:$0xf]
        %v971 = vld [vmem:[%s3 + $0xc] sm:$0xf]
        %v976 = vunpack.c.l.b16 %v968
        %v977 = vunpack.c.l.b16 %v969
        %v978 = vunpack.c.l.b16 %v970
        %v979 = vunpack.c.l.b16 %v971
        %v980 = vpack.c.b16 %v977, %v976
        %v981 = vpack.c.b16 %v979, %v978
        %v985 = vsel %vm486, %v936, 0
        %v988 = vsel %vm486, %v937, 0
        %v991 = vsel %vm486, %v938, 0
        %v994 = vsel %vm486, %v939, 0
        %v997 = vsel %vm486, %v940, 0
        %v1000 = vsel %vm486, %v941, 0
        %v1003 = vsel %vm486, %v942, 0
        %v1006 = vsel %vm486, %v943, 0
        %v1009 = vsel %vm486, %v944, 0
        %v1012 = vsel %vm486, %v945, 0
        %v1015 = vsel %vm486, %v946, 0
        %v1018 = vsel %vm486, %v947, 0
        %v1021 = vsel %vm486, %v948, 0
        %v1024 = vsel %vm486, %v949, 0
        %v1027 = vsel %vm486, %v950, 0
        %v1030 = vsel %vm486, %v951, 0
        %v1033 = vsel %vm486, %v952, 0
        %v1036 = vsel %vm486, %v953, 0
        %v1039 = vsel %vm486, %v954, 0
        %v1042 = vsel %vm486, %v955, 0
        %v1045 = vsel %vm486, %v956, 0
        %v1048 = vsel %vm486, %v957, 0
        %v1051 = vsel %vm486, %v958, 0
        %v1054 = vsel %vm486, %v959, 0
        %v1057 = vsel %vm486, %v960, 0
        %v1060 = vsel %vm486, %v961, 0
        %v1063 = vsel %vm486, %v962, 0
        %v1066 = vsel %vm486, %v963, 0
        %v1069 = vsel %vm486, %v964, 0
        %v1072 = vsel %vm486, %v965, 0
        %v1075 = vsel %vm486, %v966, 0
        %v1078 = vsel %vm486, %v967, 0
        %1080 = vmatprep.subr.bf16.mxu0 0
        %1081 = vmatpush1.bf16.msra.mxu0 %v980
        %1082 = vmatprep.subr.bf16.mxu0 0
        %1083 = vmatpush1.bf16.msra.mxu0 %v981
        %1084 = vmatprep.subr.bf16.mxu0 0
        %1085 = vmatpush1.bf16.msra.mxu0 0
        %1086 = vmatprep.subr.bf16.mxu0 0
        %1087 = vmatpush1.bf16.msra.mxu0 0
        %1088 = vmatprep.subr.bf16.mxu0 0
        %1089 = vmatpush1.bf16.msra.mxu0 0
        %1090 = vmatprep.subr.bf16.mxu0 0
        %1091 = vmatpush1.bf16.msra.mxu0 0
        %1092 = vmatprep.subr.bf16.mxu0 0
        %1093 = vmatpush1.bf16.msra.mxu0 0
        %1094 = vmatprep.subr.bf16.mxu0 0
        %1095 = vmatpush1.bf16.msra.mxu0 0
        %1096 = vmatprep.subr.bf16.mxu0 0
        %1097 = vmatpush1.bf16.msra.mxu0 0
        %1098 = vmatprep.subr.bf16.mxu0 0
        %1099 = vmatpush1.bf16.msra.mxu0 0
        %1100 = vmatprep.subr.bf16.mxu0 0
        %1101 = vmatpush1.bf16.msra.mxu0 0
        %1102 = vmatprep.subr.bf16.mxu0 0
        %1103 = vmatpush1.bf16.msra.mxu0 0
        %1104 = vmatprep.subr.bf16.mxu0 0
        %1105 = vmatpush1.bf16.msra.mxu0 0
        %1106 = vmatprep.subr.bf16.mxu0 0
        %1107 = vmatpush1.bf16.msra.mxu0 0
        %1108 = vmatprep.subr.bf16.mxu0 0
        %1109 = vmatpush1.bf16.msra.mxu0 0
        %1110 = vmatprep.subr.bf16.mxu0 0
        %1111 = vmatpush1.bf16.msra.mxu0 0
        %1112 = vmatprep.mubr.bf16.mxu0 0
        %1113 = vmatmul.mubr.bf16.gmra.mrb[0].mxu0 %v985
        %v1114 = vpop.f32.mrb[0].mxu0
        %v1115 = vadd.f32 0.0, %v1114
        %v1116 = vpop.f32.mrb[0].mxu0
        %v1117 = vpop.f32.mrb[0].mxu0
        %v1118 = vadd.f32 0.0, %v1117
        %v1119 = vpop.f32.mrb[0].mxu0
        %1120 = vmatprep.mubr.bf16.mxu0 0
        %1121 = vmatmul.mubr.bf16.gmra.mrb[0].mxu0 %v988
        %v1122 = vpop.f32.mrb[0].mxu0
        %v1123 = vadd.f32 0.0, %v1122
        %v1124 = vpop.f32.mrb[0].mxu0
        %v1125 = vpop.f32.mrb[0].mxu0
        %v1126 = vadd.f32 0.0, %v1125
        %v1127 = vpop.f32.mrb[0].mxu0
        %1128 = vmatprep.mubr.bf16.mxu0 0
        %1129 = vmatmul.mubr.bf16.gmra.mrb[0].mxu0 %v991
        %v1130 = vpop.f32.mrb[0].mxu0
        %v1131 = vadd.f32 0.0, %v1130
        %v1132 = vpop.f32.mrb[0].mxu0
        %v1133 = vpop.f32.mrb[0].mxu0
        %v1134 = vadd.f32 0.0, %v1133
        %v1135 = vpop.f32.mrb[0].mxu0
        %1136 = vmatprep.mubr.bf16.mxu0 0
        %1137 = vmatmul.mubr.bf16.gmra.mrb[0].mxu0 %v994
        %v1138 = vpop.f32.mrb[0].mxu0
        %v1139 = vadd.f32 0.0, %v1138
        %v1140 = vpop.f32.mrb[0].mxu0
        %v1141 = vpop.f32.mrb[0].mxu0
        %v1142 = vadd.f32 0.0, %v1141
        %v1143 = vpop.f32.mrb[0].mxu0
        %1144 = vmatprep.mubr.bf16.mxu0 0
        %1145 = vmatmul.mubr.bf16.gmra.mrb[0].mxu0 %v997
        %v1146 = vpop.f32.mrb[0].mxu0
        %v1147 = vadd.f32 0.0, %v1146
        %v1148 = vpop.f32.mrb[0].mxu0
        %v1149 = vpop.f32.mrb[0].mxu0
        %v1150 = vadd.f32 0.0, %v1149
        %v1151 = vpop.f32.mrb[0].mxu0
        %1152 = vmatprep.mubr.bf16.mxu0 0
        %1153 = vmatmul.mubr.bf16.gmra.mrb[0].mxu0 %v1000
        %v1154 = vpop.f32.mrb[0].mxu0
        %v1155 = vadd.f32 0.0, %v1154
        %v1156 = vpop.f32.mrb[0].mxu0
        %v1157 = vpop.f32.mrb[0].mxu0
        %v1158 = vadd.f32 0.0, %v1157
        %v1159 = vpop.f32.mrb[0].mxu0
        %1160 = vmatprep.mubr.bf16.mxu0 0
        %1161 = vmatmul.mubr.bf16.gmra.mrb[0].mxu0 %v1003
        %v1162 = vpop.f32.mrb[0].mxu0
        %v1163 = vadd.f32 0.0, %v1162
        %v1164 = vpop.f32.mrb[0].mxu0
        %v1165 = vpop.f32.mrb[0].mxu0
        %v1166 = vadd.f32 0.0, %v1165
        %v1167 = vpop.f32.mrb[0].mxu0
        %1168 = vmatprep.mubr.bf16.mxu0 0
        %1169 = vmatmul.mubr.bf16.gmra.mrb[0].mxu0 %v1006
        %v1170 = vpop.f32.mrb[0].mxu0
        %v1171 = vadd.f32 0.0, %v1170
        %v1172 = vpop.f32.mrb[0].mxu0
        %v1173 = vpop.f32.mrb[0].mxu0
        %v1174 = vadd.f32 0.0, %v1173
        %v1175 = vpop.f32.mrb[0].mxu0
        %1176 = vmatprep.mubr.bf16.mxu0 0
        %1177 = vmatmul.mubr.bf16.gmra.mrb[0].mxu0 %v1009
        %v1178 = vpop.f32.mrb[0].mxu0
        %v1179 = vadd.f32 0.0, %v1178
        %v1180 = vpop.f32.mrb[0].mxu0
        %v1181 = vpop.f32.mrb[0].mxu0
        %v1182 = vadd.f32 0.0, %v1181
        %v1183 = vpop.f32.mrb[0].mxu0
        %1184 = vmatprep.mubr.bf16.mxu0 0
        %1185 = vmatmul.mubr.bf16.gmra.mrb[0].mxu0 %v1012
        %v1186 = vpop.f32.mrb[0].mxu0
        %v1187 = vadd.f32 0.0, %v1186
        %v1188 = vpop.f32.mrb[0].mxu0
        %v1189 = vpop.f32.mrb[0].mxu0
        %v1190 = vadd.f32 0.0, %v1189
        %v1191 = vpop.f32.mrb[0].mxu0
        %1192 = vmatprep.mubr.bf16.mxu0 0
        %1193 = vmatmul.mubr.bf16.gmra.mrb[0].mxu0 %v1015
        %v1194 = vpop.f32.mrb[0].mxu0
        %v1195 = vadd.f32 0.0, %v1194
        %v1196 = vpop.f32.mrb[0].mxu0
        %v1197 = vpop.f32.mrb[0].mxu0
        %v1198 = vadd.f32 0.0, %v1197
        %v1199 = vpop.f32.mrb[0].mxu0
        %1200 = vmatprep.mubr.bf16.mxu0 0
        %1201 = vmatmul.mubr.bf16.gmra.mrb[0].mxu0 %v1018
        %v1202 = vpop.f32.mrb[0].mxu0
        %v1203 = vadd.f32 0.0, %v1202
        %v1204 = vpop.f32.mrb[0].mxu0
        %v1205 = vpop.f32.mrb[0].mxu0
        %v1206 = vadd.f32 0.0, %v1205
        %v1207 = vpop.f32.mrb[0].mxu0
        %1208 = vmatprep.mubr.bf16.mxu0 0
        %1209 = vmatmul.mubr.bf16.gmra.mrb[0].mxu0 %v1021
        %v1210 = vpop.f32.mrb[0].mxu0
        %v1211 = vadd.f32 0.0, %v1210
        %v1212 = vpop.f32.mrb[0].mxu0
        %v1213 = vpop.f32.mrb[0].mxu0
        %v1214 = vadd.f32 0.0, %v1213
        %v1215 = vpop.f32.mrb[0].mxu0
        %1216 = vmatprep.mubr.bf16.mxu0 0
        %1217 = vmatmul.mubr.bf16.gmra.mrb[0].mxu0 %v1024
        %v1218 = vpop.f32.mrb[0].mxu0
        %v1219 = vadd.f32 0.0, %v1218
        %v1220 = vpop.f32.mrb[0].mxu0
        %v1221 = vpop.f32.mrb[0].mxu0
        %v1222 = vadd.f32 0.0, %v1221
        %v1223 = vpop.f32.mrb[0].mxu0
        %1224 = vmatprep.mubr.bf16.mxu0 0
        %1225 = vmatmul.mubr.bf16.gmra.mrb[0].mxu0 %v1027
        %v1226 = vpop.f32.mrb[0].mxu0
        %v1227 = vadd.f32 0.0, %v1226
        %v1228 = vpop.f32.mrb[0].mxu0
        %v1229 = vpop.f32.mrb[0].mxu0
        %v1230 = vadd.f32 0.0, %v1229
        %v1231 = vpop.f32.mrb[0].mxu0
        %1232 = vmatprep.mubr.bf16.mxu0 0
        %1233 = vmatmul.mubr.bf16.gmra.mrb[0].mxu0 %v1030
        %v1234 = vpop.f32.mrb[0].mxu0
        %v1235 = vadd.f32 0.0, %v1234
        %v1236 = vpop.f32.mrb[0].mxu0
        %v1237 = vpop.f32.mrb[0].mxu0
        %v1238 = vadd.f32 0.0, %v1237
        %v1239 = vpop.f32.mrb[0].mxu0
        %1240 = vmatprep.mubr.bf16.mxu0 0
        %1241 = vmatmul.mubr.bf16.gmra.mrb[0].mxu0 %v1033
        %v1242 = vpop.f32.mrb[0].mxu0
        %v1243 = vadd.f32 0.0, %v1242
        %v1244 = vpop.f32.mrb[0].mxu0
        %v1245 = vpop.f32.mrb[0].mxu0
        %v1246 = vadd.f32 0.0, %v1245
        %v1247 = vpop.f32.mrb[0].mxu0
        %1248 = vmatprep.mubr.bf16.mxu0 0
        %1249 = vmatmul.mubr.bf16.gmra.mrb[0].mxu0 %v1036
        %v1250 = vpop.f32.mrb[0].mxu0
        %v1251 = vadd.f32 0.0, %v1250
        %v1252 = vpop.f32.mrb[0].mxu0
        %v1253 = vpop.f32.mrb[0].mxu0
        %v1254 = vadd.f32 0.0, %v1253
        %v1255 = vpop.f32.mrb[0].mxu0
        %1256 = vmatprep.mubr.bf16.mxu0 0
        %1257 = vmatmul.mubr.bf16.gmra.mrb[0].mxu0 %v1039
        %v1258 = vpop.f32.mrb[0].mxu0
        %v1259 = vadd.f32 0.0, %v1258
        %v1260 = vpop.f32.mrb[0].mxu0
        %v1261 = vpop.f32.mrb[0].mxu0
        %v1262 = vadd.f32 0.0, %v1261
        %v1263 = vpop.f32.mrb[0].mxu0
        %1264 = vmatprep.mubr.bf16.mxu0 0
        %1265 = vmatmul.mubr.bf16.gmra.mrb[0].mxu0 %v1042
        %v1266 = vpop.f32.mrb[0].mxu0
        %v1267 = vadd.f32 0.0, %v1266
        %v1268 = vpop.f32.mrb[0].mxu0
        %v1269 = vpop.f32.mrb[0].mxu0
        %v1270 = vadd.f32 0.0, %v1269
        %v1271 = vpop.f32.mrb[0].mxu0
        %1272 = vmatprep.mubr.bf16.mxu0 0
        %1273 = vmatmul.mubr.bf16.gmra.mrb[0].mxu0 %v1045
        %v1274 = vpop.f32.mrb[0].mxu0
        %v1275 = vadd.f32 0.0, %v1274
        %v1276 = vpop.f32.mrb[0].mxu0
        %v1277 = vpop.f32.mrb[0].mxu0
        %v1278 = vadd.f32 0.0, %v1277
        %v1279 = vpop.f32.mrb[0].mxu0
        %1280 = vmatprep.mubr.bf16.mxu0 0
        %1281 = vmatmul.mubr.bf16.gmra.mrb[0].mxu0 %v1048
        %v1282 = vpop.f32.mrb[0].mxu0
        %v1283 = vadd.f32 0.0, %v1282
        %v1284 = vpop.f32.mrb[0].mxu0
        %v1285 = vpop.f32.mrb[0].mxu0
        %v1286 = vadd.f32 0.0, %v1285
        %v1287 = vpop.f32.mrb[0].mxu0
        %1288 = vmatprep.mubr.bf16.mxu0 0
        %1289 = vmatmul.mubr.bf16.gmra.mrb[0].mxu0 %v1051
        %v1290 = vpop.f32.mrb[0].mxu0
        %v1291 = vadd.f32 0.0, %v1290
        %v1292 = vpop.f32.mrb[0].mxu0
        %v1293 = vpop.f32.mrb[0].mxu0
        %v1294 = vadd.f32 0.0, %v1293
        %v1295 = vpop.f32.mrb[0].mxu0
        %1296 = vmatprep.mubr.bf16.mxu0 0
        %1297 = vmatmul.mubr.bf16.gmra.mrb[0].mxu0 %v1054
        %v1298 = vpop.f32.mrb[0].mxu0
        %v1299 = vadd.f32 0.0, %v1298
        %v1300 = vpop.f32.mrb[0].mxu0
        %v1301 = vpop.f32.mrb[0].mxu0
        %v1302 = vadd.f32 0.0, %v1301
        %v1303 = vpop.f32.mrb[0].mxu0
        %1304 = vmatprep.mubr.bf16.mxu0 0
        %1305 = vmatmul.mubr.bf16.gmra.mrb[0].mxu0 %v1057
        %v1306 = vpop.f32.mrb[0].mxu0
        %v1307 = vadd.f32 0.0, %v1306
        %v1308 = vpop.f32.mrb[0].mxu0
        %v1309 = vpop.f32.mrb[0].mxu0
        %v1310 = vadd.f32 0.0, %v1309
        %v1311 = vpop.f32.mrb[0].mxu0
        %1312 = vmatprep.mubr.bf16.mxu0 0
        %1313 = vmatmul.mubr.bf16.gmra.mrb[0].mxu0 %v1060
        %v1314 = vpop.f32.mrb[0].mxu0
        %v1315 = vadd.f32 0.0, %v1314
        %v1316 = vpop.f32.mrb[0].mxu0
        %v1317 = vpop.f32.mrb[0].mxu0
        %v1318 = vadd.f32 0.0, %v1317
        %v1319 = vpop.f32.mrb[0].mxu0
        %1320 = vmatprep.mubr.bf16.mxu0 0
        %1321 = vmatmul.mubr.bf16.gmra.mrb[0].mxu0 %v1063
        %v1322 = vpop.f32.mrb[0].mxu0
        %v1323 = vadd.f32 0.0, %v1322
        %v1324 = vpop.f32.mrb[0].mxu0
        %v1325 = vpop.f32.mrb[0].mxu0
        %v1326 = vadd.f32 0.0, %v1325
        %v1327 = vpop.f32.mrb[0].mxu0
        %1328 = vmatprep.mubr.bf16.mxu0 0
        %1329 = vmatmul.mubr.bf16.gmra.mrb[0].mxu0 %v1066
        %v1330 = vpop.f32.mrb[0].mxu0
        %v1331 = vadd.f32 0.0, %v1330
        %v1332 = vpop.f32.mrb[0].mxu0
        %v1333 = vpop.f32.mrb[0].mxu0
        %v1334 = vadd.f32 0.0, %v1333
        %v1335 = vpop.f32.mrb[0].mxu0
        %1336 = vmatprep.mubr.bf16.mxu0 0
        %1337 = vmatmul.mubr.bf16.gmra.mrb[0].mxu0 %v1069
        %v1338 = vpop.f32.mrb[0].mxu0
        %v1339 = vadd.f32 0.0, %v1338
        %v1340 = vpop.f32.mrb[0].mxu0
        %v1341 = vpop.f32.mrb[0].mxu0
        %v1342 = vadd.f32 0.0, %v1341
        %v1343 = vpop.f32.mrb[0].mxu0
        %1344 = vmatprep.mubr.bf16.mxu0 0
        %1345 = vmatmul.mubr.bf16.gmra.mrb[0].mxu0 %v1072
        %v1346 = vpop.f32.mrb[0].mxu0
        %v1347 = vadd.f32 0.0, %v1346
        %v1348 = vpop.f32.mrb[0].mxu0
        %v1349 = vpop.f32.mrb[0].mxu0
        %v1350 = vadd.f32 0.0, %v1349
        %v1351 = vpop.f32.mrb[0].mxu0
        %1352 = vmatprep.mubr.bf16.mxu0 0
        %1353 = vmatmul.mubr.bf16.gmra.mrb[0].mxu0 %v1075
        %v1354 = vpop.f32.mrb[0].mxu0
        %v1355 = vadd.f32 0.0, %v1354
        %v1356 = vpop.f32.mrb[0].mxu0
        %v1357 = vpop.f32.mrb[0].mxu0
        %v1358 = vadd.f32 0.0, %v1357
        %v1359 = vpop.f32.mrb[0].mxu0
        %1360 = vmatprep.mubr.bf16.mxu0 0
        %1361 = vmatmul.mubr.bf16.gmra.mrb[0].mxu0 %v1078
        %v1362 = vpop.f32.mrb[0].mxu0
        %v1363 = vadd.f32 0.0, %v1362
        %v1364 = vpop.f32.mrb[0].mxu0
        %v1365 = vpop.f32.mrb[0].mxu0
        %v1366 = vadd.f32 0.0, %v1365
        %v1367 = vpop.f32.mrb[0].mxu0
        %1368 = vdwg.mxu0
        %v1369 = vtanh.pop %v1115
        %v1370 = vtanh.pop %v1118
        %v1371 = vtanh.pop %v1123
        %v1372 = vtanh.pop %v1126
        %v1373 = vtanh.pop %v1131
        %v1374 = vtanh.pop %v1134
        %v1375 = vtanh.pop %v1139
        %v1376 = vtanh.pop %v1142
        %v1377 = vtanh.pop %v1147
        %v1378 = vtanh.pop %v1150
        %v1379 = vtanh.pop %v1155
        %v1380 = vtanh.pop %v1158
        %v1381 = vtanh.pop %v1163
        %v1382 = vtanh.pop %v1166
        %v1383 = vtanh.pop %v1171
        %v1384 = vtanh.pop %v1174
        %v1385 = vtanh.pop %v1179
        %v1386 = vtanh.pop %v1182
        %v1387 = vtanh.pop %v1187
        %v1388 = vtanh.pop %v1190
        %v1389 = vtanh.pop %v1195
        %v1390 = vtanh.pop %v1198
        %v1391 = vtanh.pop %v1203
        %v1392 = vtanh.pop %v1206
        %v1393 = vtanh.pop %v1211
        %v1394 = vtanh.pop %v1214
        %v1395 = vtanh.pop %v1219
        %v1396 = vtanh.pop %v1222
        %v1397 = vtanh.pop %v1227
        %v1398 = vtanh.pop %v1230
        %v1399 = vtanh.pop %v1235
        %v1400 = vtanh.pop %v1238
        %v1401 = vtanh.pop %v1243
        %v1402 = vtanh.pop %v1246
        %v1403 = vtanh.pop %v1251
        %v1404 = vtanh.pop %v1254
        %v1405 = vtanh.pop %v1259
        %v1406 = vtanh.pop %v1262
        %v1407 = vtanh.pop %v1267
        %v1408 = vtanh.pop %v1270
        %v1409 = vtanh.pop %v1275
        %v1410 = vtanh.pop %v1278
        %v1411 = vtanh.pop %v1283
        %v1412 = vtanh.pop %v1286
        %v1413 = vtanh.pop %v1291
        %v1414 = vtanh.pop %v1294
        %v1415 = vtanh.pop %v1299
        %v1416 = vtanh.pop %v1302
        %v1417 = vtanh.pop %v1307
        %v1418 = vtanh.pop %v1310
        %v1419 = vtanh.pop %v1315
        %v1420 = vtanh.pop %v1318
        %v1421 = vtanh.pop %v1323
        %v1422 = vtanh.pop %v1326
        %v1423 = vtanh.pop %v1331
        %v1424 = vtanh.pop %v1334
        %v1425 = vtanh.pop %v1339
        %v1426 = vtanh.pop %v1342
        %v1427 = vtanh.pop %v1347
        %v1428 = vtanh.pop %v1350
        %v1429 = vtanh.pop %v1355
        %v1430 = vtanh.pop %v1358
        %v1431 = vtanh.pop %v1363
        %v1432 = vtanh.pop %v1366
        %v1433 = vld [vmem:[%s0] sm:$0xf]
        %v1434 = vpack.c.bf16 %v1370, %v1369
        %v1435 = vpack.c.bf16 %v1372, %v1371
        %v1436 = vpack.c.bf16 %v1374, %v1373
        %v1437 = vpack.c.bf16 %v1376, %v1375
        %v1438 = vpack.c.bf16 %v1378, %v1377
        %v1439 = vpack.c.bf16 %v1380, %v1379
        %v1440 = vpack.c.bf16 %v1382, %v1381
        %v1441 = vpack.c.bf16 %v1384, %v1383
        %v1442 = vpack.c.bf16 %v1386, %v1385
        %v1443 = vpack.c.bf16 %v1388, %v1387
        %v1444 = vpack.c.bf16 %v1390, %v1389
        %v1445 = vpack.c.bf16 %v1392, %v1391
        %v1446 = vpack.c.bf16 %v1394, %v1393
        %v1447 = vpack.c.bf16 %v1396, %v1395
        %v1448 = vpack.c.bf16 %v1398, %v1397
        %v1449 = vpack.c.bf16 %v1400, %v1399
        %v1450 = vpack.c.bf16 %v1402, %v1401
        %v1451 = vpack.c.bf16 %v1404, %v1403
        %v1452 = vpack.c.bf16 %v1406, %v1405
        %v1453 = vpack.c.bf16 %v1408, %v1407
        %v1454 = vpack.c.bf16 %v1410, %v1409
        %v1455 = vpack.c.bf16 %v1412, %v1411
        %v1456 = vpack.c.bf16 %v1414, %v1413
        %v1457 = vpack.c.bf16 %v1416, %v1415
        %v1458 = vpack.c.bf16 %v1418, %v1417
        %v1459 = vpack.c.bf16 %v1420, %v1419
        %v1460 = vpack.c.bf16 %v1422, %v1421
        %v1461 = vpack.c.bf16 %v1424, %v1423
        %v1462 = vpack.c.bf16 %v1426, %v1425
        %v1463 = vpack.c.bf16 %v1428, %v1427
        %v1464 = vpack.c.bf16 %v1430, %v1429
        %v1465 = vpack.c.bf16 %v1432, %v1431
        %v1466 = vld [vmem:[%s242] sm:$0xf]
        %v1468 = vlaneseq
        %v1469 = vshrl.u32 %v1468, 7
        %v1470 = vsub.s32 0, %v1469
        %v1471 = vrot.slane %v1466, %v1470
        %v1472 = vlaneseq
        %v1473 = vshrl.u32 %v1472, 7
        %v1474 = vsub.s32 1, %v1473
        %v1475 = vrot.slane %v1466, %v1474
        %v1476 = vlaneseq
        %v1477 = vshrl.u32 %v1476, 7
        %v1478 = vsub.s32 2, %v1477
        %v1479 = vrot.slane %v1466, %v1478
        %v1480 = vlaneseq
        %v1481 = vshrl.u32 %v1480, 7
        %v1482 = vsub.s32 3, %v1481
        %v1483 = vrot.slane %v1466, %v1482
        %v1489 = vsel %vm486, %v1433, 0
        %v1492 = vsel %vm486, %v1434, 0
        %v1495 = vsel %vm486, %v1435, 0
        %v1498 = vsel %vm486, %v1436, 0
        %v1501 = vsel %vm486, %v1437, 0
        %v1504 = vsel %vm486, %v1438, 0
        %v1507 = vsel %vm486, %v1439, 0
        %v1510 = vsel %vm486, %v1440, 0
        %v1513 = vsel %vm486, %v1441, 0
        %v1516 = vsel %vm486, %v1442, 0
        %v1519 = vsel %vm486, %v1443, 0
        %v1522 = vsel %vm486, %v1444, 0
        %v1525 = vsel %vm486, %v1445, 0
        %v1528 = vsel %vm486, %v1446, 0
        %v1531 = vsel %vm486, %v1447, 0
        %v1534 = vsel %vm486, %v1448, 0
        %v1537 = vsel %vm486, %v1449, 0
        %v1540 = vsel %vm486, %v1450, 0
        %v1543 = vsel %vm486, %v1451, 0
        %v1546 = vsel %vm486, %v1452, 0
        %v1549 = vsel %vm486, %v1453, 0
        %v1552 = vsel %vm486, %v1454, 0
        %v1555 = vsel %vm486, %v1455, 0
        %v1558 = vsel %vm486, %v1456, 0
        %v1561 = vsel %vm486, %v1457, 0
        %v1564 = vsel %vm486, %v1458, 0
        %v1567 = vsel %vm486, %v1459, 0
        %v1570 = vsel %vm486, %v1460, 0
        %v1573 = vsel %vm486, %v1461, 0
        %v1576 = vsel %vm486, %v1462, 0
        %v1579 = vsel %vm486, %v1463, 0
        %v1582 = vsel %vm486, %v1464, 0
        %v1585 = vsel %vm486, %v1465, 0
        %1587 = vmatprep.subr.bf16.mxu0 0
        %1588 = vmatpush1.bf16.xpose.msra.mxu0 %v1492
        %1589 = vmatprep.subr.bf16.mxu0 0
        %1590 = vmatpush1.bf16.xpose.msra.mxu0 %v1495
        %1591 = vmatprep.subr.bf16.mxu0 0
        %1592 = vmatpush1.bf16.xpose.msra.mxu0 %v1498
        %1593 = vmatprep.subr.bf16.mxu0 0
        %1594 = vmatpush1.bf16.xpose.msra.mxu0 %v1501
        %1595 = vmatprep.subr.bf16.mxu0 0
        %1596 = vmatpush1.bf16.xpose.msra.mxu0 %v1504
        %1597 = vmatprep.subr.bf16.mxu0 0
        %1598 = vmatpush1.bf16.xpose.msra.mxu0 %v1507
        %1599 = vmatprep.subr.bf16.mxu0 0
        %1600 = vmatpush1.bf16.xpose.msra.mxu0 %v1510
        %1601 = vmatprep.subr.bf16.mxu0 0
        %1602 = vmatpush1.bf16.xpose.msra.mxu0 %v1513
        %1603 = vmatprep.subr.bf16.mxu0 0
        %1604 = vmatpush1.bf16.xpose.msra.mxu0 %v1516
        %1605 = vmatprep.subr.bf16.mxu0 0
        %1606 = vmatpush1.bf16.xpose.msra.mxu0 %v1519
        %1607 = vmatprep.subr.bf16.mxu0 0
        %1608 = vmatpush1.bf16.xpose.msra.mxu0 %v1522
        %1609 = vmatprep.subr.bf16.mxu0 0
        %1610 = vmatpush1.bf16.xpose.msra.mxu0 %v1525
        %1611 = vmatprep.subr.bf16.mxu0 0
        %1612 = vmatpush1.bf16.xpose.msra.mxu0 %v1528
        %1613 = vmatprep.subr.bf16.mxu0 0
        %1614 = vmatpush1.bf16.xpose.msra.mxu0 %v1531
        %1615 = vmatprep.subr.bf16.mxu0 0
        %1616 = vmatpush1.bf16.xpose.msra.mxu0 %v1534
        %1617 = vmatprep.subr.bf16.mxu0 0
        %1618 = vmatpush1.bf16.xpose.msra.mxu0 %v1537
        %1619 = vmatprep.mubr.bf16.mxu0 0
        %1620 = vmatmul.mubr.bf16.gmra.mrb[0].mxu0 %v1489
        %v1621 = vpop.f32.mrb[0].mxu0
        %v1622 = vadd.f32 %v1471, %v1621
        %v1623 = vpop.f32.mrb[0].mxu0
        %v1624 = vadd.f32 %v1475, %v1623
        %v1625 = vpop.f32.mrb[0].mxu0
        %v1626 = vpop.f32.mrb[0].mxu0
        %1627 = vdwg.mxu0
        %1628 = vmatprep.subr.bf16.mxu0 0
        %1629 = vmatpush1.bf16.xpose.msra.mxu0 %v1540
        %1630 = vmatprep.subr.bf16.mxu0 0
        %1631 = vmatpush1.bf16.xpose.msra.mxu0 %v1543
        %1632 = vmatprep.subr.bf16.mxu0 0
        %1633 = vmatpush1.bf16.xpose.msra.mxu0 %v1546
        %1634 = vmatprep.subr.bf16.mxu0 0
        %1635 = vmatpush1.bf16.xpose.msra.mxu0 %v1549
        %1636 = vmatprep.subr.bf16.mxu0 0
        %1637 = vmatpush1.bf16.xpose.msra.mxu0 %v1552
        %1638 = vmatprep.subr.bf16.mxu0 0
        %1639 = vmatpush1.bf16.xpose.msra.mxu0 %v1555
        %1640 = vmatprep.subr.bf16.mxu0 0
        %1641 = vmatpush1.bf16.xpose.msra.mxu0 %v1558
        %1642 = vmatprep.subr.bf16.mxu0 0
        %1643 = vmatpush1.bf16.xpose.msra.mxu0 %v1561
        %1644 = vmatprep.subr.bf16.mxu0 0
        %1645 = vmatpush1.bf16.xpose.msra.mxu0 %v1564
        %1646 = vmatprep.subr.bf16.mxu0 0
        %1647 = vmatpush1.bf16.xpose.msra.mxu0 %v1567
        %1648 = vmatprep.subr.bf16.mxu0 0
        %1649 = vmatpush1.bf16.xpose.msra.mxu0 %v1570
        %1650 = vmatprep.subr.bf16.mxu0 0
        %1651 = vmatpush1.bf16.xpose.msra.mxu0 %v1573
        %1652 = vmatprep.subr.bf16.mxu0 0
        %1653 = vmatpush1.bf16.xpose.msra.mxu0 %v1576
        %1654 = vmatprep.subr.bf16.mxu0 0
        %1655 = vmatpush1.bf16.xpose.msra.mxu0 %v1579
        %1656 = vmatprep.subr.bf16.mxu0 0
        %1657 = vmatpush1.bf16.xpose.msra.mxu0 %v1582
        %1658 = vmatprep.subr.bf16.mxu0 0
        %1659 = vmatpush1.bf16.xpose.msra.mxu0 %v1585
        %1660 = vmatprep.mubr.bf16.mxu0 0
        %1661 = vmatmul.mubr.bf16.gmra.mrb[0].mxu0 %v1489
        %v1662 = vpop.f32.mrb[0].mxu0
        %v1663 = vadd.f32 %v1479, %v1662
        %v1664 = vpop.f32.mrb[0].mxu0
        %v1665 = vadd.f32 %v1483, %v1664
        %v1666 = vpop.f32.mrb[0].mxu0
        %v1667 = vpop.f32.mrb[0].mxu0
        %1668 = vdwg.mxu0
        %v1669 = vxor.u32 %v1622, 2147483648
        %v1670 = vxor.u32 %v1624, 2147483648
        %v1671 = vxor.u32 %v1663, 2147483648
        %v1672 = vxor.u32 %v1665, 2147483648
        %v1673 = vmul.f32 %v1669, 1.442695
        %v1674 = vpow.pop %v1673
        %v1675 = vmul.f32 %v1670, 1.442695
        %v1676 = vpow.pop %v1675
        %v1677 = vmul.f32 %v1671, 1.442695
        %v1678 = vpow.pop %v1677
        %v1679 = vmul.f32 %v1672, 1.442695
        %v1680 = vpow.pop %v1679
        %v1681 = vadd.f32 %v1674, 1.0
        %v1682 = vadd.f32 %v1676, 1.0
        %v1683 = vadd.f32 %v1678, 1.0
        %v1684 = vadd.f32 %v1680, 1.0
        %v1685 = vrcp.pop %v1681
        %v1686 = vmul.f32 1.0, %v1685
        %v1687 = vrcp.pop %v1682
        %v1688 = vmul.f32 1.0, %v1687
        %v1689 = vrcp.pop %v1683
        %v1690 = vmul.f32 1.0, %v1689
        %v1691 = vrcp.pop %v1684
        %v1692 = vmul.f32 1.0, %v1691
        %1693 = vst [vmem:[%s232] sm:$0xff] %v1686
        %1694 = vst [vmem:[%s232 + $0x8] sm:$0xff] %v1688
        %1695 = vst [vmem:[%s232 + $0x10] sm:$0xff] %v1690
        %1696 = vst [vmem:[%s232 + $0x18] sm:$0xff] %v1692
        %s1697 = sand.u32 %s142, 1
        %s1698 = scalar_lea.sflag [#allocation3], %s1697
        %s1699 = sand.u32 %s142, 1
        %s1700 = smul.addr %s1699, 32
        %s1701 = scalar_lea.vmem [#allocation2], %s1700
        // Predicated region
        $region41: #{compgcn_conve_forward.3} parent=39 // pred_check
          %p1702 = pneg %p152
        $region42: #{compgcn_conve_forward.3} parent=39 // pred_check_branch
          %1704 = sbr.rel (%p1702) target = $region44
        $region43: #{compgcn_conve_forward.3} parent=39 // pred_region
          %s1705 = smul.u32 4, %s19
          %s1707 = ssub.s32 512, 512
          %1708 = vsyncadd %s1698, %s1707
          %s1709 = smul.addr %s1705, 128
          %s1710 = scalar_lea.hbm %s5, %s1709
          %s1712 = sshll.u32 %s1701, 4
          %s1713 = int_to_ptr.vmem [resolvable:$true] %s1712
          %1715 = dma.vmem_to_hbm [thread:$0]  %s1713, 512, %s1710, %s1698
        $region44: #{compgcn_conve_forward.3} parent=39 // pred_fallthru
          _
      $region40: #{compgcn_conve_forward.3} parent=5 // pred_fallthru
        _
      %p1716 = scmp.le.s32.totalorder 2, %s14
      // Predicated region
      $region45: #{compgcn_conve_forward.3} parent=5 // pred_check
        %p1717 = pneg %p1716
      $region46: #{compgcn_conve_forward.3} parent=5 // pred_check_branch
        %1719 = sbr.rel (%p1717) target = $region48
      $region47: #{compgcn_conve_forward.3} parent=5 // pred_region
        %s1720 = ssub.s32 %s14, 2
        // Predicated region
        $region49: #{compgcn_conve_forward.3} parent=47 // pred_check
          %p1721 = pneg %p158
        $region50: #{compgcn_conve_forward.3} parent=47 // pred_check_branch
          %1723 = sbr.rel (%p1721) target = $region52
        $region51: #{compgcn_conve_forward.3} parent=47 // pred_region
          %s1724 = sand.u32 %s143, 1
          %s1725 = scalar_lea.sflag [#allocation3], %s1724
          %s1726 = sand.u32 %s143, 1
          %s1727 = smul.addr %s1726, 32
          %s1728 = scalar_lea.vmem [#allocation2], %s1727
          %1729 = dma.done %s1725, 512
        $region52: #{compgcn_conve_forward.3} parent=47 // pred_fallthru
          _
      $region48: #{compgcn_conve_forward.3} parent=5 // pred_fallthru
        _
    $region6: #{compgcn_conve_forward.3} parent=1 // loop_footer
      %s18 = sadd.s32 1, %s14
    $region7: #{compgcn_conve_forward.3} parent=1 // loop_footer_branch
      %13 = sbr.rel target = $region3
    $region8: #{compgcn_conve_forward.3} parent=1 // loop_exit
      _
    %1730 = vsyncpa [#allocation3], 1
    %s1731 = scalar_lea.sflag [#allocation3], 1
    %1732 = vsyncpa %s1731, 1

</llo_original>
